<compile_context>
chip_gen: v5e
topology: v5e:2x2
jax: 0.10.0
libtpu: 0.0.40
codegen_flags: <defaults>
</compile_context>

<pallas_src>
import numpy as np
import jax
import jax.numpy as jnp
from jax.experimental import pallas as pl
from jax.experimental.pallas import tpu as pltpu

EPS = 1e-5  # PyTorch BatchNorm2d default


# ------------------------------ host-side glue -------------------------------
def init_params(key):
    # Deterministic synthetic parameters for the *live* part of the network.
    # TODO(synk): layer1..layer3 BasicBlock parameters are omitted on purpose:
    # BasicBlock.forward returns F.relu(x), so those weights never affect the output.
    ks = jax.random.split(key, 7)
    conv_w = 0.1 * jax.random.normal(ks[0], (16, 3, 3, 3), jnp.float32)   # OIHW
    gamma = 1.0 + 0.1 * jax.random.normal(ks[1], (16,), jnp.float32)
    beta = 0.1 * jax.random.normal(ks[2], (16,), jnp.float32)
    run_mean = 0.1 * jax.random.normal(ks[3], (16,), jnp.float32)
    run_var = 1.0 + 0.1 * jax.random.uniform(ks[4], (16,), jnp.float32)
    lin_w = 0.1 * jax.random.normal(ks[5], (10, 64), jnp.float32)         # (out, in)
    lin_b = 0.1 * jax.random.normal(ks[6], (10,), jnp.float32)
    return conv_w, gamma, beta, run_mean, run_var, lin_w, lin_b


@jax.jit
def resnet_forward(x_nchw, params):
    conv_w, gamma, beta, run_mean, run_var, lin_w, lin_b = params
    B, Cin, H, W = x_nchw.shape
    # avg_pool2d(., 16) + Linear(64) pin the live network to 3x32x32 inputs.
    assert H == 32 and W == 32 and Cin == 3, "effective forward requires 3x32x32 input"
    Cout = conv_w.shape[0]           # 16
    HW = H * W                       # 1024
    N = B * HW                       # flat spatial lanes (2048 at B=2)
    NCLS = lin_w.shape[0]            # 10
    OPAD = 16                        # class rows padded to a sublane tile
    KPOOL = (H // 16) * (W // 16)    # 4 pool windows per image
    KPAD = 32                        # im2col K = 9*Cin = 27, padded to 32

    # ---- constant folding / layout prep (runs once, fused under jit) ----
    # BN(eval) folded into conv weights and one bias.
    scale = gamma * jax.lax.rsqrt(run_var + EPS)                          # (16,)
    bn_bias = (beta - run_mean * scale).reshape(Cout, 1)                  # (16, 1) f32
    wcol = jnp.transpose(conv_w, (0, 2, 3, 1)).reshape(Cout, 9 * Cin)     # col=(dy*3+dx)*Cin+ci
    wcol = wcol * scale[:, None]
    wcol = jnp.pad(wcol, ((0, 0), (0, KPAD - 9 * Cin))).astype(jnp.bfloat16)   # (16, 32)

    # Host-side im2col: row = tap*Cin + ci, col = b*HW + h*W + w (zero-padded edges).
    xp = jnp.pad(x_nchw, ((0, 0), (0, 0), (1, 1), (1, 1)))
    taps = [xp[:, :, dy:dy + H, dx:dx + W] for dy in range(3) for dx in range(3)]
    xcol = jnp.stack(taps, axis=0)                                        # (9, B, Cin, H, W)
    xcol = jnp.transpose(xcol, (0, 2, 1, 3, 4)).reshape(9 * Cin, N)       # (27, N)
    xcol = jnp.pad(xcol, ((0, KPAD - 9 * Cin), (0, 0))).astype(jnp.bfloat16)   # (32, N)

    # Pool-membership matrix: pm[p, k*B + b] = 1/256 iff lane p lies in image b and
    # pool window k = (h//16)*(W//16) + (w//16).  (1/256 = 2^-8 exact in bf16.)
    p = np.arange(N)
    b_idx = p // HW
    h_pos = (p % HW) // W
    w_pos = p % W
    kwin = (h_pos // 16) * (W // 16) + (w_pos // 16)
    pm_np = np.zeros((N, KPOOL * B), np.float32)
    pm_np[p, kwin * B + b_idx] = 1.0 / 256.0
    pm = jnp.asarray(pm_np).astype(jnp.bfloat16)                          # (N, KPOOL*B)

    # Head weights regrouped to match the sublane-stacked feature layout:
    #   wcat[o, k*Cout + c] = lin_w[o, c*KPOOL + k]    (rows o >= NCLS zero-padded)
    wcat = jnp.transpose(lin_w.reshape(NCLS, Cout, KPOOL), (0, 2, 1))
    wcat = wcat.reshape(NCLS, KPOOL * Cout)
    wcat = jnp.pad(wcat, ((0, OPAD - NCLS), (0, 0)))                      # (16, 64) f32
    lbias = jnp.pad(lin_b, (0, OPAD - NCLS)).reshape(OPAD, 1)             # (16, 1) f32

    # ------------------------------- the kernel --------------------------------
    def kernel(xcol_ref, wcol_ref, bnb_ref, pm_ref, wcat_ref, lb_ref, out_ref):
        # conv1 (+ folded BN): single MXU dot, bf16 x bf16 -> f32; bias + ReLU on VPU.
        y = jnp.dot(wcol_ref[...], xcol_ref[...], preferred_element_type=jnp.float32)
        y = jnp.maximum(y + bnb_ref[...], 0.0)                            # (Cout, N) f32

        # 16x16 avg pool = one MXU contraction over the flat-spatial lanes (K = N).
        pooled = jnp.dot(y.astype(jnp.bfloat16), pm_ref[...],
                         preferred_element_type=jnp.float32)              # (Cout, KPOOL*B)

        # Stack the per-window (Cout, B) blocks along sublanes -> (KPOOL*Cout, B)
        # features in NCHW-flatten order, then one head dot + bias, one dense store.
        feat = jnp.concatenate(
            [pooled[:, k * B:(k + 1) * B] for k in range(KPOOL)], axis=0)  # (64, B)
        out_ref[...] = (jnp.dot(wcat_ref[...], feat,
                                preferred_element_type=jnp.float32)
                        + lb_ref[...])                                     # (OPAD, B)

    out_t = pl.pallas_call(
        kernel,
        out_shape=jax.ShapeDtypeStruct((OPAD, B), jnp.float32),
        in_specs=[pl.BlockSpec(memory_space=pltpu.MemorySpace.VMEM)] * 6,
        out_specs=pl.BlockSpec(memory_space=pltpu.MemorySpace.VMEM),
    )(xcol, wcol, bn_bias, pm, wcat, lbias)

    # Tiny logits slice + transpose (80 bytes), fused into the jitted graph.
    return out_t[:NCLS, :].T


def reference_forward(x_nchw, params):
    # Pure-JAX reference reproducing the effective PyTorch forward.
    conv_w, gamma, beta, run_mean, run_var, lin_w, lin_b = params
    y = jax.lax.conv_general_dilated(
        x_nchw, conv_w, window_strides=(1, 1), padding=((1, 1), (1, 1)),
        dimension_numbers=("NCHW", "OIHW", "NCHW"))
    y = (y - run_mean[None, :, None, None]) * (
        gamma[None, :, None, None] / jnp.sqrt(run_var[None, :, None, None] + EPS)
    ) + beta[None, :, None, None]
    y = jnp.maximum(y, 0.0)
    B, C, H, W = y.shape
    pooled = y.reshape(B, C, 2, H // 2, 2, W // 2).mean(axis=(3, 5))      # (B, C, 2, 2)
    feat = pooled.reshape(B, C * 4)                                       # NCHW flatten
    return feat @ lin_w.T + lin_b


if __name__ == "__main__":
    key = jax.random.PRNGKey(0)
    kx, kp = jax.random.split(key)
    x = jax.random.normal(kx, (2, 3, 32, 32), jnp.float32)   # NCHW, CIFAR-sized
    params = init_params(kp)

    out = resnet_forward(x, params)
    out = jax.block_until_ready(out)
    assert out.shape == (2, 10) and out.dtype == jnp.float32

    ref = reference_forward(x, params)
    err = float(jnp.max(jnp.abs(out - ref)))
    assert err < 2e-2, f"mismatch vs reference: {err}"   # bf16 MXU operands, f32 accum
    print("KERNEL_OK")
</pallas_src>

<mosaic_0001>
module attributes {stable_mosaic.version = 11 : i64} {
  func.func @kernel(%arg0: memref<32x2048xbf16, #tpu.memory_space<vmem>>, %arg1: memref<16x32xbf16, #tpu.memory_space<vmem>>, %arg2: memref<16x1xf32, #tpu.memory_space<vmem>>, %arg3: memref<2048x8xbf16, #tpu.memory_space<vmem>>, %arg4: memref<16x64xf32, #tpu.memory_space<vmem>>, %arg5: memref<16x1xf32, #tpu.memory_space<vmem>>, %arg6: memref<16x2xf32, #tpu.memory_space<vmem>>) attributes {dimension_semantics = [], scalar_prefetch = 0 : i64, scratch_operands = 0 : i64, tpu.core_type = #tpu.core_type<tc>} {
    %c0 = arith.constant 0 : index
    %c0_0 = arith.constant 0 : index
    %0 = vector.load %arg1[%c0, %c0_0] : memref<16x32xbf16, #tpu.memory_space<vmem>>, vector<16x32xbf16>
    %c0_1 = arith.constant 0 : index
    %c0_2 = arith.constant 0 : index
    %1 = vector.load %arg0[%c0_1, %c0_2] : memref<32x2048xbf16, #tpu.memory_space<vmem>>, vector<32x2048xbf16>
    %cst = arith.constant dense<0.000000e+00> : vector<16x2048xf32>
    %2 = tpu.matmul %0, %1, %cst {dimension_numbers = #tpu.dot_dimension_numbers<[1], [0], [0], [1], [0, 0, 1, 1], [], []>} : vector<16x32xbf16>, vector<32x2048xbf16>, vector<16x2048xf32> -> vector<16x2048xf32>
    %c0_3 = arith.constant 0 : index
    %c0_4 = arith.constant 0 : index
    %3 = vector.load %arg2[%c0_3, %c0_4] : memref<16x1xf32, #tpu.memory_space<vmem>>, vector<16x1xf32>
    %4 = vector.broadcast %3 : vector<16x1xf32> to vector<16x2048xf32>
    %5 = arith.addf %2, %4 : vector<16x2048xf32>
    %cst_5 = arith.constant 0.000000e+00 : f32
    %6 = vector.broadcast %cst_5 : f32 to vector<16x2048xf32>
    %7 = arith.maximumf %5, %6 : vector<16x2048xf32>
    %8 = arith.truncf %7 : vector<16x2048xf32> to vector<16x2048xbf16>
    %c0_6 = arith.constant 0 : index
    %c0_7 = arith.constant 0 : index
    %9 = vector.load %arg3[%c0_6, %c0_7] : memref<2048x8xbf16, #tpu.memory_space<vmem>>, vector<2048x8xbf16>
    %cst_8 = arith.constant dense<0.000000e+00> : vector<16x8xf32>
    %10 = tpu.matmul %8, %9, %cst_8 {dimension_numbers = #tpu.dot_dimension_numbers<[1], [0], [0], [1], [0, 0, 1, 1], [], []>} : vector<16x2048xbf16>, vector<2048x8xbf16>, vector<16x8xf32> -> vector<16x8xf32>
    %11 = vector.extract_strided_slice %10 {offsets = [0, 0], sizes = [16, 2], strides = [1, 1]} : vector<16x8xf32> to vector<16x2xf32>
    %12 = vector.extract_strided_slice %10 {offsets = [0, 2], sizes = [16, 2], strides = [1, 1]} : vector<16x8xf32> to vector<16x2xf32>
    %13 = vector.extract_strided_slice %10 {offsets = [0, 4], sizes = [16, 2], strides = [1, 1]} : vector<16x8xf32> to vector<16x2xf32>
    %14 = vector.extract_strided_slice %10 {offsets = [0, 6], sizes = [16, 2], strides = [1, 1]} : vector<16x8xf32> to vector<16x2xf32>
    %15 = tpu.concatenate %11, %12, %13, %14 in 0 : vector<16x2xf32>, vector<16x2xf32>, vector<16x2xf32>, vector<16x2xf32> -> vector<64x2xf32>
    %c0_9 = arith.constant 0 : index
    %c0_10 = arith.constant 0 : index
    %16 = vector.load %arg4[%c0_9, %c0_10] : memref<16x64xf32, #tpu.memory_space<vmem>>, vector<16x64xf32>
    %cst_11 = arith.constant dense<0.000000e+00> : vector<16x2xf32>
    %17 = tpu.matmul %16, %15, %cst_11 {dimension_numbers = #tpu.dot_dimension_numbers<[1], [0], [0], [1], [0, 0, 1, 1], [], []>} : vector<16x64xf32>, vector<64x2xf32>, vector<16x2xf32> -> vector<16x2xf32>
    %c0_12 = arith.constant 0 : index
    %c0_13 = arith.constant 0 : index
    %18 = vector.load %arg5[%c0_12, %c0_13] : memref<16x1xf32, #tpu.memory_space<vmem>>, vector<16x1xf32>
    %19 = vector.broadcast %18 : vector<16x1xf32> to vector<16x2xf32>
    %20 = arith.addf %17, %19 : vector<16x2xf32>
    %c0_14 = arith.constant 0 : index
    %c0_15 = arith.constant 0 : index
    %21 = vector.load %arg6[%c0_14, %c0_15] : memref<16x2xf32, #tpu.memory_space<vmem>>, vector<16x2xf32>
    tpu.vector_store %arg6[%c0_14, %c0_15], %20 {strides = array<i32>} : memref<16x2xf32, #tpu.memory_space<vmem>>, vector<16x2xf32>,
    return
  }
}

</mosaic_0001>

<llo_original>
// kernel: resnet_forward.1
$region0: #{resnet_forward.1}
  #allocation0 [shape = 'u32[]', space=smem, size = 0x4, offset = 0x4, fixed_abs, tag = 'smem constant byte address 0x4 - core index']
  #allocation1 [shape = 'u32[72,128]{1,0:T(1,128)}', space=vmem, size = 0x9000, scoped, tag = 'internal scratch']
  %s0 = inlined_call_operand.vmem [shape: bf16[32,2048], index: 0, kind: input, shape index: {}]
  %s1 = inlined_call_operand.vmem [shape: bf16[16,32], index: 1, kind: input, shape index: {}]
  %s2 = inlined_call_operand.vmem [shape: f32[16,1], index: 2, kind: input, shape index: {}]
  %s3 = inlined_call_operand.vmem [shape: bf16[2048,8], index: 3, kind: input, shape index: {}]
  %s4 = inlined_call_operand.vmem [shape: f32[16,64], index: 4, kind: input, shape index: {}]
  %s5 = inlined_call_operand.vmem [shape: f32[16,1], index: 5, kind: input, shape index: {}]
  %s6 = inlined_call_operand.vmem [shape: f32[16,2], index: 6, kind: output, shape index: {}]
  %s7 = sld [smem:[#allocation0]]
  $region34: #{resnet_forward.1} parent=0
    _
  %s9 = ssub.s32 1, %s7
  %s10 = scalar_select 0, %s9, %s7
  // Predicated region
  $region2: #{resnet_forward.1} parent=0 // pred_check
    _
  $region3: #{resnet_forward.1} parent=0 // pred_check_branch
    %12 = sbr.rel (0) target = $region5
  $region4: #{resnet_forward.1} parent=0 // pred_region
    _
  $region5: #{resnet_forward.1} parent=0 // pred_fallthru
    _
  // Predicated region
  $region6: #{resnet_forward.1} parent=0 // pred_check
    _
  $region7: #{resnet_forward.1} parent=0 // pred_check_branch
    %14 = sbr.rel (0) target = $region9
  $region8: #{resnet_forward.1} parent=0 // pred_region
    _
  $region9: #{resnet_forward.1} parent=0 // pred_fallthru
    _
  // Predicated region
  $region10: #{resnet_forward.1} parent=0 // pred_check
    _
  $region11: #{resnet_forward.1} parent=0 // pred_check_branch
    %16 = sbr.rel (0) target = $region13
  $region12: #{resnet_forward.1} parent=0 // pred_region
    _
  $region13: #{resnet_forward.1} parent=0 // pred_fallthru
    _
  // Predicated region
  $region14: #{resnet_forward.1} parent=0 // pred_check
    _
  $region15: #{resnet_forward.1} parent=0 // pred_check_branch
    %18 = sbr.rel (0) target = $region17
  $region16: #{resnet_forward.1} parent=0 // pred_region
    _
  $region17: #{resnet_forward.1} parent=0 // pred_fallthru
    _
  // Predicated region
  $region18: #{resnet_forward.1} parent=0 // pred_check
    _
  $region19: #{resnet_forward.1} parent=0 // pred_check_branch
    %20 = sbr.rel (0) target = $region21
  $region20: #{resnet_forward.1} parent=0 // pred_region
    _
  $region21: #{resnet_forward.1} parent=0 // pred_fallthru
    _
  // Predicated region
  $region22: #{resnet_forward.1} parent=0 // pred_check
    _
  $region23: #{resnet_forward.1} parent=0 // pred_check_branch
    %22 = sbr.rel (0) target = $region25
  $region24: #{resnet_forward.1} parent=0 // pred_region
    _
  $region25: #{resnet_forward.1} parent=0 // pred_fallthru
    _
  %v24 = vld [vmem:[%s1] sm:$0xf]
  %v25 = vld [vmem:[%s1 + $0x4] sm:$0xf]
  %v26 = vld [vmem:[%s0] sm:$0xff]
  %v27 = vld [vmem:[%s0 + $0x8] sm:$0xff]
  %v28 = vld [vmem:[%s0 + $0x10] sm:$0xff]
  %v29 = vld [vmem:[%s0 + $0x18] sm:$0xff]
  %v30 = vld [vmem:[%s0 + $0x20] sm:$0xff]
  %v31 = vld [vmem:[%s0 + $0x28] sm:$0xff]
  %v32 = vld [vmem:[%s0 + $0x30] sm:$0xff]
  %v33 = vld [vmem:[%s0 + $0x38] sm:$0xff]
  %v34 = vld [vmem:[%s0 + $0x40] sm:$0xff]
  %v35 = vld [vmem:[%s0 + $0x48] sm:$0xff]
  %v36 = vld [vmem:[%s0 + $0x50] sm:$0xff]
  %v37 = vld [vmem:[%s0 + $0x58] sm:$0xff]
  %v38 = vld [vmem:[%s0 + $0x60] sm:$0xff]
  %v39 = vld [vmem:[%s0 + $0x68] sm:$0xff]
  %v40 = vld [vmem:[%s0 + $0x70] sm:$0xff]
  %v41 = vld [vmem:[%s0 + $0x78] sm:$0xff]
  %v42 = vld [vmem:[%s0 + $0x80] sm:$0xff]
  %v43 = vld [vmem:[%s0 + $0x88] sm:$0xff]
  %v44 = vld [vmem:[%s0 + $0x90] sm:$0xff]
  %v45 = vld [vmem:[%s0 + $0x98] sm:$0xff]
  %v46 = vld [vmem:[%s0 + $0xa0] sm:$0xff]
  %v47 = vld [vmem:[%s0 + $0xa8] sm:$0xff]
  %v48 = vld [vmem:[%s0 + $0xb0] sm:$0xff]
  %v49 = vld [vmem:[%s0 + $0xb8] sm:$0xff]
  %v50 = vld [vmem:[%s0 + $0xc0] sm:$0xff]
  %v51 = vld [vmem:[%s0 + $0xc8] sm:$0xff]
  %v52 = vld [vmem:[%s0 + $0xd0] sm:$0xff]
  %v53 = vld [vmem:[%s0 + $0xd8] sm:$0xff]
  %v54 = vld [vmem:[%s0 + $0xe0] sm:$0xff]
  %v55 = vld [vmem:[%s0 + $0xe8] sm:$0xff]
  %v56 = vld [vmem:[%s0 + $0xf0] sm:$0xff]
  %v57 = vld [vmem:[%s0 + $0xf8] sm:$0xff]
  %v58 = vld [vmem:[%s2] sm:$0xff]
  %v59 = vld [vmem:[%s2 + $0x8] sm:$0xff]
  %61 = vset.pattern.permute.xlu0 0
  %62 = vperm.xlu0 %61, %v58
  %v63 = vpop.permute.xlu0 %62
  %66 = vset.pattern.permute.xlu0 0
  %67 = vperm.xlu0 %66, %v59
  %v68 = vpop.permute.xlu0 %67
  %v72 = vunpack.c.l.b16 %v24
  %v73 = vunpack.c.l.b16 %v25
  %v74 = vpack.c.b16 %v73, %v72
  %v107 = vunpack.c.l.b16 %v26
  %v108 = vunpack.c.h.b16 %v26
  %v109 = vunpack.c.l.b16 %v27
  %v110 = vunpack.c.h.b16 %v27
  %v111 = vunpack.c.l.b16 %v28
  %v112 = vunpack.c.h.b16 %v28
  %v113 = vunpack.c.l.b16 %v29
  %v114 = vunpack.c.h.b16 %v29
  %v115 = vunpack.c.l.b16 %v30
  %v116 = vunpack.c.h.b16 %v30
  %v117 = vunpack.c.l.b16 %v31
  %v118 = vunpack.c.h.b16 %v31
  %v119 = vunpack.c.l.b16 %v32
  %v120 = vunpack.c.h.b16 %v32
  %v121 = vunpack.c.l.b16 %v33
  %v122 = vunpack.c.h.b16 %v33
  %v123 = vunpack.c.l.b16 %v34
  %v124 = vunpack.c.h.b16 %v34
  %v125 = vunpack.c.l.b16 %v35
  %v126 = vunpack.c.h.b16 %v35
  %v127 = vunpack.c.l.b16 %v36
  %v128 = vunpack.c.h.b16 %v36
  %v129 = vunpack.c.l.b16 %v37
  %v130 = vunpack.c.h.b16 %v37
  %v131 = vunpack.c.l.b16 %v38
  %v132 = vunpack.c.h.b16 %v38
  %v133 = vunpack.c.l.b16 %v39
  %v134 = vunpack.c.h.b16 %v39
  %v135 = vunpack.c.l.b16 %v40
  %v136 = vunpack.c.h.b16 %v40
  %v137 = vunpack.c.l.b16 %v41
  %v138 = vunpack.c.h.b16 %v41
  %v139 = vunpack.c.l.b16 %v42
  %v140 = vunpack.c.h.b16 %v42
  %v141 = vunpack.c.l.b16 %v43
  %v142 = vunpack.c.h.b16 %v43
  %v143 = vunpack.c.l.b16 %v44
  %v144 = vunpack.c.h.b16 %v44
  %v145 = vunpack.c.l.b16 %v45
  %v146 = vunpack.c.h.b16 %v45
  %v147 = vunpack.c.l.b16 %v46
  %v148 = vunpack.c.h.b16 %v46
  %v149 = vunpack.c.l.b16 %v47
  %v150 = vunpack.c.h.b16 %v47
  %v151 = vunpack.c.l.b16 %v48
  %v152 = vunpack.c.h.b16 %v48
  %v153 = vunpack.c.l.b16 %v49
  %v154 = vunpack.c.h.b16 %v49
  %v155 = vunpack.c.l.b16 %v50
  %v156 = vunpack.c.h.b16 %v50
  %v157 = vunpack.c.l.b16 %v51
  %v158 = vunpack.c.h.b16 %v51
  %v159 = vunpack.c.l.b16 %v52
  %v160 = vunpack.c.h.b16 %v52
  %v161 = vunpack.c.l.b16 %v53
  %v162 = vunpack.c.h.b16 %v53
  %v163 = vunpack.c.l.b16 %v54
  %v164 = vunpack.c.h.b16 %v54
  %v165 = vunpack.c.l.b16 %v55
  %v166 = vunpack.c.h.b16 %v55
  %v167 = vunpack.c.l.b16 %v56
  %v168 = vunpack.c.h.b16 %v56
  %v169 = vunpack.c.l.b16 %v57
  %v170 = vunpack.c.h.b16 %v57
  %v171 = vpack.c.b16 %v123, %v107
  %v172 = vpack.c.b16 %v124, %v108
  %v173 = vpack.c.b16 %v125, %v109
  %v174 = vpack.c.b16 %v126, %v110
  %v175 = vpack.c.b16 %v127, %v111
  %v176 = vpack.c.b16 %v128, %v112
  %v177 = vpack.c.b16 %v129, %v113
  %v178 = vpack.c.b16 %v130, %v114
  %v179 = vpack.c.b16 %v131, %v115
  %v180 = vpack.c.b16 %v132, %v116
  %v181 = vpack.c.b16 %v133, %v117
  %v182 = vpack.c.b16 %v134, %v118
  %v183 = vpack.c.b16 %v135, %v119
  %v184 = vpack.c.b16 %v136, %v120
  %v185 = vpack.c.b16 %v137, %v121
  %v186 = vpack.c.b16 %v138, %v122
  %v187 = vpack.c.b16 %v155, %v139
  %v188 = vpack.c.b16 %v156, %v140
  %v189 = vpack.c.b16 %v157, %v141
  %v190 = vpack.c.b16 %v158, %v142
  %v191 = vpack.c.b16 %v159, %v143
  %v192 = vpack.c.b16 %v160, %v144
  %v193 = vpack.c.b16 %v161, %v145
  %v194 = vpack.c.b16 %v162, %v146
  %v195 = vpack.c.b16 %v163, %v147
  %v196 = vpack.c.b16 %v164, %v148
  %v197 = vpack.c.b16 %v165, %v149
  %v198 = vpack.c.b16 %v166, %v150
  %v199 = vpack.c.b16 %v167, %v151
  %v200 = vpack.c.b16 %v168, %v152
  %v201 = vpack.c.b16 %v169, %v153
  %v202 = vpack.c.b16 %v170, %v154
  %vm235 = vcmask 261120
  %v237 = vsel %vm235, %v74, 0
  %239 = vmatpush.bf16.msra.mxu0 0
  %240 = vmatpush.bf16.msra.mxu0 0
  %241 = vmatpush.bf16.msra.mxu0 0
  %242 = vmatpush.bf16.msra.mxu0 0
  %243 = vmatpush.bf16.msra.mxu0 0
  %244 = vmatpush.bf16.msra.mxu0 0
  %245 = vmatpush.bf16.msra.mxu0 %v187
  %246 = vmatpush.bf16.msra.mxu0 %v171
  %247 = vmatmul.bf16.gmra.mxu0 %v237
  %v248 = vpop.f32.mrf.mxu0
  %v249 = vadd.f32 %v63, %v248
  %v250 = vpop.f32.mrf.mxu0
  %v251 = vadd.f32 %v68, %v250
  %252 = vdwg.mxu0
  %253 = vmatpush.bf16.msra.mxu0 0
  %254 = vmatpush.bf16.msra.mxu0 0
  %255 = vmatpush.bf16.msra.mxu0 0
  %256 = vmatpush.bf16.msra.mxu0 0
  %257 = vmatpush.bf16.msra.mxu0 0
  %258 = vmatpush.bf16.msra.mxu0 0
  %259 = vmatpush.bf16.msra.mxu0 %v188
  %260 = vmatpush.bf16.msra.mxu0 %v172
  %261 = vmatmul.bf16.gmra.mxu0 %v237
  %v262 = vpop.f32.mrf.mxu0
  %v263 = vadd.f32 %v63, %v262
  %v264 = vpop.f32.mrf.mxu0
  %v265 = vadd.f32 %v68, %v264
  %266 = vdwg.mxu0
  %267 = vmatpush.bf16.msra.mxu0 0
  %268 = vmatpush.bf16.msra.mxu0 0
  %269 = vmatpush.bf16.msra.mxu0 0
  %270 = vmatpush.bf16.msra.mxu0 0
  %271 = vmatpush.bf16.msra.mxu0 0
  %272 = vmatpush.bf16.msra.mxu0 0
  %273 = vmatpush.bf16.msra.mxu0 %v189
  %274 = vmatpush.bf16.msra.mxu0 %v173
  %275 = vmatmul.bf16.gmra.mxu0 %v237
  %v276 = vpop.f32.mrf.mxu0
  %v277 = vadd.f32 %v63, %v276
  %v278 = vpop.f32.mrf.mxu0
  %v279 = vadd.f32 %v68, %v278
  %280 = vdwg.mxu0
  %281 = vmatpush.bf16.msra.mxu0 0
  %282 = vmatpush.bf16.msra.mxu0 0
  %283 = vmatpush.bf16.msra.mxu0 0
  %284 = vmatpush.bf16.msra.mxu0 0
  %285 = vmatpush.bf16.msra.mxu0 0
  %286 = vmatpush.bf16.msra.mxu0 0
  %287 = vmatpush.bf16.msra.mxu0 %v190
  %288 = vmatpush.bf16.msra.mxu0 %v174
  %289 = vmatmul.bf16.gmra.mxu0 %v237
  %v290 = vpop.f32.mrf.mxu0
  %v291 = vadd.f32 %v63, %v290
  %v292 = vpop.f32.mrf.mxu0
  %v293 = vadd.f32 %v68, %v292
  %294 = vdwg.mxu0
  %295 = vmatpush.bf16.msra.mxu0 0
  %296 = vmatpush.bf16.msra.mxu0 0
  %297 = vmatpush.bf16.msra.mxu0 0
  %298 = vmatpush.bf16.msra.mxu0 0
  %299 = vmatpush.bf16.msra.mxu0 0
  %300 = vmatpush.bf16.msra.mxu0 0
  %301 = vmatpush.bf16.msra.mxu0 %v191
  %302 = vmatpush.bf16.msra.mxu0 %v175
  %303 = vmatmul.bf16.gmra.mxu0 %v237
  %v304 = vpop.f32.mrf.mxu0
  %v305 = vadd.f32 %v63, %v304
  %v306 = vpop.f32.mrf.mxu0
  %v307 = vadd.f32 %v68, %v306
  %308 = vdwg.mxu0
  %309 = vmatpush.bf16.msra.mxu0 0
  %310 = vmatpush.bf16.msra.mxu0 0
  %311 = vmatpush.bf16.msra.mxu0 0
  %312 = vmatpush.bf16.msra.mxu0 0
  %313 = vmatpush.bf16.msra.mxu0 0
  %314 = vmatpush.bf16.msra.mxu0 0
  %315 = vmatpush.bf16.msra.mxu0 %v192
  %316 = vmatpush.bf16.msra.mxu0 %v176
  %317 = vmatmul.bf16.gmra.mxu0 %v237
  %v318 = vpop.f32.mrf.mxu0
  %v319 = vadd.f32 %v63, %v318
  %v320 = vpop.f32.mrf.mxu0
  %v321 = vadd.f32 %v68, %v320
  %322 = vdwg.mxu0
  %323 = vmatpush.bf16.msra.mxu0 0
  %324 = vmatpush.bf16.msra.mxu0 0
  %325 = vmatpush.bf16.msra.mxu0 0
  %326 = vmatpush.bf16.msra.mxu0 0
  %327 = vmatpush.bf16.msra.mxu0 0
  %328 = vmatpush.bf16.msra.mxu0 0
  %329 = vmatpush.bf16.msra.mxu0 %v193
  %330 = vmatpush.bf16.msra.mxu0 %v177
  %331 = vmatmul.bf16.gmra.mxu0 %v237
  %v332 = vpop.f32.mrf.mxu0
  %v333 = vadd.f32 %v63, %v332
  %v334 = vpop.f32.mrf.mxu0
  %v335 = vadd.f32 %v68, %v334
  %336 = vdwg.mxu0
  %337 = vmatpush.bf16.msra.mxu0 0
  %338 = vmatpush.bf16.msra.mxu0 0
  %339 = vmatpush.bf16.msra.mxu0 0
  %340 = vmatpush.bf16.msra.mxu0 0
  %341 = vmatpush.bf16.msra.mxu0 0
  %342 = vmatpush.bf16.msra.mxu0 0
  %343 = vmatpush.bf16.msra.mxu0 %v194
  %344 = vmatpush.bf16.msra.mxu0 %v178
  %345 = vmatmul.bf16.gmra.mxu0 %v237
  %v346 = vpop.f32.mrf.mxu0
  %v347 = vadd.f32 %v63, %v346
  %v348 = vpop.f32.mrf.mxu0
  %v349 = vadd.f32 %v68, %v348
  %350 = vdwg.mxu0
  %351 = vmatpush.bf16.msra.mxu0 0
  %352 = vmatpush.bf16.msra.mxu0 0
  %353 = vmatpush.bf16.msra.mxu0 0
  %354 = vmatpush.bf16.msra.mxu0 0
  %355 = vmatpush.bf16.msra.mxu0 0
  %356 = vmatpush.bf16.msra.mxu0 0
  %357 = vmatpush.bf16.msra.mxu0 %v195
  %358 = vmatpush.bf16.msra.mxu0 %v179
  %359 = vmatmul.bf16.gmra.mxu0 %v237
  %v360 = vpop.f32.mrf.mxu0
  %v361 = vadd.f32 %v63, %v360
  %v362 = vpop.f32.mrf.mxu0
  %v363 = vadd.f32 %v68, %v362
  %364 = vdwg.mxu0
  %365 = vmatpush.bf16.msra.mxu0 0
  %366 = vmatpush.bf16.msra.mxu0 0
  %367 = vmatpush.bf16.msra.mxu0 0
  %368 = vmatpush.bf16.msra.mxu0 0
  %369 = vmatpush.bf16.msra.mxu0 0
  %370 = vmatpush.bf16.msra.mxu0 0
  %371 = vmatpush.bf16.msra.mxu0 %v196
  %372 = vmatpush.bf16.msra.mxu0 %v180
  %373 = vmatmul.bf16.gmra.mxu0 %v237
  %v374 = vpop.f32.mrf.mxu0
  %v375 = vadd.f32 %v63, %v374
  %v376 = vpop.f32.mrf.mxu0
  %v377 = vadd.f32 %v68, %v376
  %378 = vdwg.mxu0
  %379 = vmatpush.bf16.msra.mxu0 0
  %380 = vmatpush.bf16.msra.mxu0 0
  %381 = vmatpush.bf16.msra.mxu0 0
  %382 = vmatpush.bf16.msra.mxu0 0
  %383 = vmatpush.bf16.msra.mxu0 0
  %384 = vmatpush.bf16.msra.mxu0 0
  %385 = vmatpush.bf16.msra.mxu0 %v197
  %386 = vmatpush.bf16.msra.mxu0 %v181
  %387 = vmatmul.bf16.gmra.mxu0 %v237
  %v388 = vpop.f32.mrf.mxu0
  %v389 = vadd.f32 %v63, %v388
  %v390 = vpop.f32.mrf.mxu0
  %v391 = vadd.f32 %v68, %v390
  %392 = vdwg.mxu0
  %393 = vmatpush.bf16.msra.mxu0 0
  %394 = vmatpush.bf16.msra.mxu0 0
  %395 = vmatpush.bf16.msra.mxu0 0
  %396 = vmatpush.bf16.msra.mxu0 0
  %397 = vmatpush.bf16.msra.mxu0 0
  %398 = vmatpush.bf16.msra.mxu0 0
  %399 = vmatpush.bf16.msra.mxu0 %v198
  %400 = vmatpush.bf16.msra.mxu0 %v182
  %401 = vmatmul.bf16.gmra.mxu0 %v237
  %v402 = vpop.f32.mrf.mxu0
  %v403 = vadd.f32 %v63, %v402
  %v404 = vpop.f32.mrf.mxu0
  %v405 = vadd.f32 %v68, %v404
  %406 = vdwg.mxu0
  %407 = vmatpush.bf16.msra.mxu0 0
  %408 = vmatpush.bf16.msra.mxu0 0
  %409 = vmatpush.bf16.msra.mxu0 0
  %410 = vmatpush.bf16.msra.mxu0 0
  %411 = vmatpush.bf16.msra.mxu0 0
  %412 = vmatpush.bf16.msra.mxu0 0
  %413 = vmatpush.bf16.msra.mxu0 %v199
  %414 = vmatpush.bf16.msra.mxu0 %v183
  %415 = vmatmul.bf16.gmra.mxu0 %v237
  %v416 = vpop.f32.mrf.mxu0
  %v417 = vadd.f32 %v63, %v416
  %v418 = vpop.f32.mrf.mxu0
  %v419 = vadd.f32 %v68, %v418
  %420 = vdwg.mxu0
  %421 = vmatpush.bf16.msra.mxu0 0
  %422 = vmatpush.bf16.msra.mxu0 0
  %423 = vmatpush.bf16.msra.mxu0 0
  %424 = vmatpush.bf16.msra.mxu0 0
  %425 = vmatpush.bf16.msra.mxu0 0
  %426 = vmatpush.bf16.msra.mxu0 0
  %427 = vmatpush.bf16.msra.mxu0 %v200
  %428 = vmatpush.bf16.msra.mxu0 %v184
  %429 = vmatmul.bf16.gmra.mxu0 %v237
  %v430 = vpop.f32.mrf.mxu0
  %v431 = vadd.f32 %v63, %v430
  %v432 = vpop.f32.mrf.mxu0
  %v433 = vadd.f32 %v68, %v432
  %434 = vdwg.mxu0
  %435 = vmatpush.bf16.msra.mxu0 0
  %436 = vmatpush.bf16.msra.mxu0 0
  %437 = vmatpush.bf16.msra.mxu0 0
  %438 = vmatpush.bf16.msra.mxu0 0
  %439 = vmatpush.bf16.msra.mxu0 0
  %440 = vmatpush.bf16.msra.mxu0 0
  %441 = vmatpush.bf16.msra.mxu0 %v201
  %442 = vmatpush.bf16.msra.mxu0 %v185
  %443 = vmatmul.bf16.gmra.mxu0 %v237
  %v444 = vpop.f32.mrf.mxu0
  %v445 = vadd.f32 %v63, %v444
  %v446 = vpop.f32.mrf.mxu0
  %v447 = vadd.f32 %v68, %v446
  %448 = vdwg.mxu0
  %449 = vmatpush.bf16.msra.mxu0 0
  %450 = vmatpush.bf16.msra.mxu0 0
  %451 = vmatpush.bf16.msra.mxu0 0
  %452 = vmatpush.bf16.msra.mxu0 0
  %453 = vmatpush.bf16.msra.mxu0 0
  %454 = vmatpush.bf16.msra.mxu0 0
  %455 = vmatpush.bf16.msra.mxu0 %v202
  %456 = vmatpush.bf16.msra.mxu0 %v186
  %457 = vmatmul.bf16.gmra.mxu0 %v237
  %v458 = vpop.f32.mrf.mxu0
  %v459 = vadd.f32 %v63, %v458
  %v460 = vpop.f32.mrf.mxu0
  %v461 = vadd.f32 %v68, %v460
  %462 = vdwg.mxu0
  %v463 = vmax.f32 %v249, 0.0
  %v464 = vmax.f32 %v263, 0.0
  %v465 = vmax.f32 %v277, 0.0
  %v466 = vmax.f32 %v291, 0.0
  %v467 = vmax.f32 %v305, 0.0
  %v468 = vmax.f32 %v319, 0.0
  %v469 = vmax.f32 %v333, 0.0
  %v470 = vmax.f32 %v347, 0.0
  %v471 = vmax.f32 %v361, 0.0
  %v472 = vmax.f32 %v375, 0.0
  %v473 = vmax.f32 %v389, 0.0
  %v474 = vmax.f32 %v403, 0.0
  %v475 = vmax.f32 %v417, 0.0
  %v476 = vmax.f32 %v431, 0.0
  %v477 = vmax.f32 %v445, 0.0
  %v478 = vmax.f32 %v459, 0.0
  %v479 = vmax.f32 %v251, 0.0
  %v480 = vmax.f32 %v265, 0.0
  %v481 = vmax.f32 %v279, 0.0
  %v482 = vmax.f32 %v293, 0.0
  %v483 = vmax.f32 %v307, 0.0
  %v484 = vmax.f32 %v321, 0.0
  %v485 = vmax.f32 %v335, 0.0
  %v486 = vmax.f32 %v349, 0.0
  %v487 = vmax.f32 %v363, 0.0
  %v488 = vmax.f32 %v377, 0.0
  %v489 = vmax.f32 %v391, 0.0
  %v490 = vmax.f32 %v405, 0.0
  %v491 = vmax.f32 %v419, 0.0
  %v492 = vmax.f32 %v433, 0.0
  %v493 = vmax.f32 %v447, 0.0
  %v494 = vmax.f32 %v461, 0.0
  %v495 = vpack.c.bf16 %v479, %v463
  %v496 = vpack.c.bf16 %v480, %v464
  %v497 = vpack.c.bf16 %v481, %v465
  %v498 = vpack.c.bf16 %v482, %v466
  %v499 = vpack.c.bf16 %v483, %v467
  %v500 = vpack.c.bf16 %v484, %v468
  %v501 = vpack.c.bf16 %v485, %v469
  %v502 = vpack.c.bf16 %v486, %v470
  %v503 = vpack.c.bf16 %v487, %v471
  %v504 = vpack.c.bf16 %v488, %v472
  %v505 = vpack.c.bf16 %v489, %v473
  %v506 = vpack.c.bf16 %v490, %v474
  %v507 = vpack.c.bf16 %v491, %v475
  %v508 = vpack.c.bf16 %v492, %v476
  %v509 = vpack.c.bf16 %v493, %v477
  %v510 = vpack.c.bf16 %v494, %v478
  %v511 = vld [vmem:[%s3] sm:$0xf]
  %v512 = vld [vmem:[%s3 + $0x4] sm:$0xf]
  %v513 = vld [vmem:[%s3 + $0x8] sm:$0xf]
  %v514 = vld [vmem:[%s3 + $0xc] sm:$0xf]
  %v515 = vld [vmem:[%s3 + $0x10] sm:$0xf]
  %v516 = vld [vmem:[%s3 + $0x14] sm:$0xf]
  %v517 = vld [vmem:[%s3 + $0x18] sm:$0xf]
  %v518 = vld [vmem:[%s3 + $0x1c] sm:$0xf]
  %v519 = vld [vmem:[%s3 + $0x20] sm:$0xf]
  %v520 = vld [vmem:[%s3 + $0x24] sm:$0xf]
  %v521 = vld [vmem:[%s3 + $0x28] sm:$0xf]
  %v522 = vld [vmem:[%s3 + $0x2c] sm:$0xf]
  %v523 = vld [vmem:[%s3 + $0x30] sm:$0xf]
  %v524 = vld [vmem:[%s3 + $0x34] sm:$0xf]
  %v525 = vld [vmem:[%s3 + $0x38] sm:$0xf]
  %v526 = vld [vmem:[%s3 + $0x3c] sm:$0xf]
  %v527 = vld [vmem:[%s3 + $0x40] sm:$0xf]
  %v528 = vld [vmem:[%s3 + $0x44] sm:$0xf]
  %v529 = vld [vmem:[%s3 + $0x48] sm:$0xf]
  %v530 = vld [vmem:[%s3 + $0x4c] sm:$0xf]
  %v531 = vld [vmem:[%s3 + $0x50] sm:$0xf]
  %v532 = vld [vmem:[%s3 + $0x54] sm:$0xf]
  %v533 = vld [vmem:[%s3 + $0x58] sm:$0xf]
  %v534 = vld [vmem:[%s3 + $0x5c] sm:$0xf]
  %v535 = vld [vmem:[%s3 + $0x60] sm:$0xf]
  %v536 = vld [vmem:[%s3 + $0x64] sm:$0xf]
  %v537 = vld [vmem:[%s3 + $0x68] sm:$0xf]
  %v538 = vld [vmem:[%s3 + $0x6c] sm:$0xf]
  %v539 = vld [vmem:[%s3 + $0x70] sm:$0xf]
  %v540 = vld [vmem:[%s3 + $0x74] sm:$0xf]
  %v541 = vld [vmem:[%s3 + $0x78] sm:$0xf]
  %v542 = vld [vmem:[%s3 + $0x7c] sm:$0xf]
  %v543 = vld [vmem:[%s3 + $0x80] sm:$0xf]
  %v544 = vld [vmem:[%s3 + $0x84] sm:$0xf]
  %v545 = vld [vmem:[%s3 + $0x88] sm:$0xf]
  %v546 = vld [vmem:[%s3 + $0x8c] sm:$0xf]
  %v547 = vld [vmem:[%s3 + $0x90] sm:$0xf]
  %v548 = vld [vmem:[%s3 + $0x94] sm:$0xf]
  %v549 = vld [vmem:[%s3 + $0x98] sm:$0xf]
  %v550 = vld [vmem:[%s3 + $0x9c] sm:$0xf]
  %v551 = vld [vmem:[%s3 + $0xa0] sm:$0xf]
  %v552 = vld [vmem:[%s3 + $0xa4] sm:$0xf]
  %v553 = vld [vmem:[%s3 + $0xa8] sm:$0xf]
  %v554 = vld [vmem:[%s3 + $0xac] sm:$0xf]
  %v555 = vld [vmem:[%s3 + $0xb0] sm:$0xf]
  %v556 = vld [vmem:[%s3 + $0xb4] sm:$0xf]
  %v557 = vld [vmem:[%s3 + $0xb8] sm:$0xf]
  %v558 = vld [vmem:[%s3 + $0xbc] sm:$0xf]
  %v559 = vld [vmem:[%s3 + $0xc0] sm:$0xf]
  %v560 = vld [vmem:[%s3 + $0xc4] sm:$0xf]
  %v561 = vld [vmem:[%s3 + $0xc8] sm:$0xf]
  %v562 = vld [vmem:[%s3 + $0xcc] sm:$0xf]
  %v563 = vld [vmem:[%s3 + $0xd0] sm:$0xf]
  %v564 = vld [vmem:[%s3 + $0xd4] sm:$0xf]
  %v565 = vld [vmem:[%s3 + $0xd8] sm:$0xf]
  %v566 = vld [vmem:[%s3 + $0xdc] sm:$0xf]
  %v567 = vld [vmem:[%s3 + $0xe0] sm:$0xf]
  %v568 = vld [vmem:[%s3 + $0xe4] sm:$0xf]
  %v569 = vld [vmem:[%s3 + $0xe8] sm:$0xf]
  %v570 = vld [vmem:[%s3 + $0xec] sm:$0xf]
  %v571 = vld [vmem:[%s3 + $0xf0] sm:$0xf]
  %v572 = vld [vmem:[%s3 + $0xf4] sm:$0xf]
  %v573 = vld [vmem:[%s3 + $0xf8] sm:$0xf]
  %v574 = vld [vmem:[%s3 + $0xfc] sm:$0xf]
  %v575 = vld [vmem:[%s3 + $0x100] sm:$0xf]
  %v576 = vld [vmem:[%s3 + $0x104] sm:$0xf]
  %v577 = vld [vmem:[%s3 + $0x108] sm:$0xf]
  %v578 = vld [vmem:[%s3 + $0x10c] sm:$0xf]
  %v579 = vld [vmem:[%s3 + $0x110] sm:$0xf]
  %v580 = vld [vmem:[%s3 + $0x114] sm:$0xf]
  %v581 = vld [vmem:[%s3 + $0x118] sm:$0xf]
  %v582 = vld [vmem:[%s3 + $0x11c] sm:$0xf]
  %v583 = vld [vmem:[%s3 + $0x120] sm:$0xf]
  %v584 = vld [vmem:[%s3 + $0x124] sm:$0xf]
  %v585 = vld [vmem:[%s3 + $0x128] sm:$0xf]
  %v586 = vld [vmem:[%s3 + $0x12c] sm:$0xf]
  %v587 = vld [vmem:[%s3 + $0x130] sm:$0xf]
  %v588 = vld [vmem:[%s3 + $0x134] sm:$0xf]
  %v589 = vld [vmem:[%s3 + $0x138] sm:$0xf]
  %v590 = vld [vmem:[%s3 + $0x13c] sm:$0xf]
  %v591 = vld [vmem:[%s3 + $0x140] sm:$0xf]
  %v592 = vld [vmem:[%s3 + $0x144] sm:$0xf]
  %v593 = vld [vmem:[%s3 + $0x148] sm:$0xf]
  %v594 = vld [vmem:[%s3 + $0x14c] sm:$0xf]
  %v595 = vld [vmem:[%s3 + $0x150] sm:$0xf]
  %v596 = vld [vmem:[%s3 + $0x154] sm:$0xf]
  %v597 = vld [vmem:[%s3 + $0x158] sm:$0xf]
  %v598 = vld [vmem:[%s3 + $0x15c] sm:$0xf]
  %v599 = vld [vmem:[%s3 + $0x160] sm:$0xf]
  %v600 = vld [vmem:[%s3 + $0x164] sm:$0xf]
  %v601 = vld [vmem:[%s3 + $0x168] sm:$0xf]
  %v602 = vld [vmem:[%s3 + $0x16c] sm:$0xf]
  %v603 = vld [vmem:[%s3 + $0x170] sm:$0xf]
  %v604 = vld [vmem:[%s3 + $0x174] sm:$0xf]
  %v605 = vld [vmem:[%s3 + $0x178] sm:$0xf]
  %v606 = vld [vmem:[%s3 + $0x17c] sm:$0xf]
  %v607 = vld [vmem:[%s3 + $0x180] sm:$0xf]
  %v608 = vld [vmem:[%s3 + $0x184] sm:$0xf]
  %v609 = vld [vmem:[%s3 + $0x188] sm:$0xf]
  %v610 = vld [vmem:[%s3 + $0x18c] sm:$0xf]
  %v611 = vld [vmem:[%s3 + $0x190] sm:$0xf]
  %v612 = vld [vmem:[%s3 + $0x194] sm:$0xf]
  %v613 = vld [vmem:[%s3 + $0x198] sm:$0xf]
  %v614 = vld [vmem:[%s3 + $0x19c] sm:$0xf]
  %v615 = vld [vmem:[%s3 + $0x1a0] sm:$0xf]
  %v616 = vld [vmem:[%s3 + $0x1a4] sm:$0xf]
  %v617 = vld [vmem:[%s3 + $0x1a8] sm:$0xf]
  %v618 = vld [vmem:[%s3 + $0x1ac] sm:$0xf]
  %v619 = vld [vmem:[%s3 + $0x1b0] sm:$0xf]
  %v620 = vld [vmem:[%s3 + $0x1b4] sm:$0xf]
  %v621 = vld [vmem:[%s3 + $0x1b8] sm:$0xf]
  %v622 = vld [vmem:[%s3 + $0x1bc] sm:$0xf]
  %v623 = vld [vmem:[%s3 + $0x1c0] sm:$0xf]
  %v624 = vld [vmem:[%s3 + $0x1c4] sm:$0xf]
  %v625 = vld [vmem:[%s3 + $0x1c8] sm:$0xf]
  %v626 = vld [vmem:[%s3 + $0x1cc] sm:$0xf]
  %v627 = vld [vmem:[%s3 + $0x1d0] sm:$0xf]
  %v628 = vld [vmem:[%s3 + $0x1d4] sm:$0xf]
  %v629 = vld [vmem:[%s3 + $0x1d8] sm:$0xf]
  %v630 = vld [vmem:[%s3 + $0x1dc] sm:$0xf]
  %v631 = vld [vmem:[%s3 + $0x1e0] sm:$0xf]
  %v632 = vld [vmem:[%s3 + $0x1e4] sm:$0xf]
  %v633 = vld [vmem:[%s3 + $0x1e8] sm:$0xf]
  %v634 = vld [vmem:[%s3 + $0x1ec] sm:$0xf]
  %v635 = vld [vmem:[%s3 + $0x1f0] sm:$0xf]
  %v636 = vld [vmem:[%s3 + $0x1f4] sm:$0xf]
  %v637 = vld [vmem:[%s3 + $0x1f8] sm:$0xf]
  %v638 = vld [vmem:[%s3 + $0x1fc] sm:$0xf]
  %v639 = vld [vmem:[%s3 + $0x200] sm:$0xf]
  %v640 = vld [vmem:[%s3 + $0x204] sm:$0xf]
  %v641 = vld [vmem:[%s3 + $0x208] sm:$0xf]
  %v642 = vld [vmem:[%s3 + $0x20c] sm:$0xf]
  %v643 = vld [vmem:[%s3 + $0x210] sm:$0xf]
  %v644 = vld [vmem:[%s3 + $0x214] sm:$0xf]
  %v645 = vld [vmem:[%s3 + $0x218] sm:$0xf]
  %v646 = vld [vmem:[%s3 + $0x21c] sm:$0xf]
  %v647 = vld [vmem:[%s3 + $0x220] sm:$0xf]
  %v648 = vld [vmem:[%s3 + $0x224] sm:$0xf]
  %v649 = vld [vmem:[%s3 + $0x228] sm:$0xf]
  %v650 = vld [vmem:[%s3 + $0x22c] sm:$0xf]
  %v651 = vld [vmem:[%s3 + $0x230] sm:$0xf]
  %v652 = vld [vmem:[%s3 + $0x234] sm:$0xf]
  %v653 = vld [vmem:[%s3 + $0x238] sm:$0xf]
  %v654 = vld [vmem:[%s3 + $0x23c] sm:$0xf]
  %v655 = vld [vmem:[%s3 + $0x240] sm:$0xf]
  %v656 = vld [vmem:[%s3 + $0x244] sm:$0xf]
  %v657 = vld [vmem:[%s3 + $0x248] sm:$0xf]
  %v658 = vld [vmem:[%s3 + $0x24c] sm:$0xf]
  %v659 = vld [vmem:[%s3 + $0x250] sm:$0xf]
  %v660 = vld [vmem:[%s3 + $0x254] sm:$0xf]
  %v661 = vld [vmem:[%s3 + $0x258] sm:$0xf]
  %v662 = vld [vmem:[%s3 + $0x25c] sm:$0xf]
  %v663 = vld [vmem:[%s3 + $0x260] sm:$0xf]
  %v664 = vld [vmem:[%s3 + $0x264] sm:$0xf]
  %v665 = vld [vmem:[%s3 + $0x268] sm:$0xf]
  %v666 = vld [vmem:[%s3 + $0x26c] sm:$0xf]
  %v667 = vld [vmem:[%s3 + $0x270] sm:$0xf]
  %v668 = vld [vmem:[%s3 + $0x274] sm:$0xf]
  %v669 = vld [vmem:[%s3 + $0x278] sm:$0xf]
  %v670 = vld [vmem:[%s3 + $0x27c] sm:$0xf]
  %v671 = vld [vmem:[%s3 + $0x280] sm:$0xf]
  %v672 = vld [vmem:[%s3 + $0x284] sm:$0xf]
  %v673 = vld [vmem:[%s3 + $0x288] sm:$0xf]
  %v674 = vld [vmem:[%s3 + $0x28c] sm:$0xf]
  %v675 = vld [vmem:[%s3 + $0x290] sm:$0xf]
  %v676 = vld [vmem:[%s3 + $0x294] sm:$0xf]
  %v677 = vld [vmem:[%s3 + $0x298] sm:$0xf]
  %v678 = vld [vmem:[%s3 + $0x29c] sm:$0xf]
  %v679 = vld [vmem:[%s3 + $0x2a0] sm:$0xf]
  %v680 = vld [vmem:[%s3 + $0x2a4] sm:$0xf]
  %v681 = vld [vmem:[%s3 + $0x2a8] sm:$0xf]
  %v682 = vld [vmem:[%s3 + $0x2ac] sm:$0xf]
  %v683 = vld [vmem:[%s3 + $0x2b0] sm:$0xf]
  %v684 = vld [vmem:[%s3 + $0x2b4] sm:$0xf]
  %v685 = vld [vmem:[%s3 + $0x2b8] sm:$0xf]
  %v686 = vld [vmem:[%s3 + $0x2bc] sm:$0xf]
  %v687 = vld [vmem:[%s3 + $0x2c0] sm:$0xf]
  %v688 = vld [vmem:[%s3 + $0x2c4] sm:$0xf]
  %v689 = vld [vmem:[%s3 + $0x2c8] sm:$0xf]
  %v690 = vld [vmem:[%s3 + $0x2cc] sm:$0xf]
  %v691 = vld [vmem:[%s3 + $0x2d0] sm:$0xf]
  %v692 = vld [vmem:[%s3 + $0x2d4] sm:$0xf]
  %v693 = vld [vmem:[%s3 + $0x2d8] sm:$0xf]
  %v694 = vld [vmem:[%s3 + $0x2dc] sm:$0xf]
  %v695 = vld [vmem:[%s3 + $0x2e0] sm:$0xf]
  %v696 = vld [vmem:[%s3 + $0x2e4] sm:$0xf]
  %v697 = vld [vmem:[%s3 + $0x2e8] sm:$0xf]
  %v698 = vld [vmem:[%s3 + $0x2ec] sm:$0xf]
  %v699 = vld [vmem:[%s3 + $0x2f0] sm:$0xf]
  %v700 = vld [vmem:[%s3 + $0x2f4] sm:$0xf]
  %v701 = vld [vmem:[%s3 + $0x2f8] sm:$0xf]
  %v702 = vld [vmem:[%s3 + $0x2fc] sm:$0xf]
  %v703 = vld [vmem:[%s3 + $0x300] sm:$0xf]
  %v704 = vld [vmem:[%s3 + $0x304] sm:$0xf]
  %v705 = vld [vmem:[%s3 + $0x308] sm:$0xf]
  %v706 = vld [vmem:[%s3 + $0x30c] sm:$0xf]
  %v707 = vld [vmem:[%s3 + $0x310] sm:$0xf]
  %v708 = vld [vmem:[%s3 + $0x314] sm:$0xf]
  %v709 = vld [vmem:[%s3 + $0x318] sm:$0xf]
  %v710 = vld [vmem:[%s3 + $0x31c] sm:$0xf]
  %v711 = vld [vmem:[%s3 + $0x320] sm:$0xf]
  %v712 = vld [vmem:[%s3 + $0x324] sm:$0xf]
  %v713 = vld [vmem:[%s3 + $0x328] sm:$0xf]
  %v714 = vld [vmem:[%s3 + $0x32c] sm:$0xf]
  %v715 = vld [vmem:[%s3 + $0x330] sm:$0xf]
  %v716 = vld [vmem:[%s3 + $0x334] sm:$0xf]
  %v717 = vld [vmem:[%s3 + $0x338] sm:$0xf]
  %v718 = vld [vmem:[%s3 + $0x33c] sm:$0xf]
  %v719 = vld [vmem:[%s3 + $0x340] sm:$0xf]
  %v720 = vld [vmem:[%s3 + $0x344] sm:$0xf]
  %v721 = vld [vmem:[%s3 + $0x348] sm:$0xf]
  %v722 = vld [vmem:[%s3 + $0x34c] sm:$0xf]
  %v723 = vld [vmem:[%s3 + $0x350] sm:$0xf]
  %v724 = vld [vmem:[%s3 + $0x354] sm:$0xf]
  %v725 = vld [vmem:[%s3 + $0x358] sm:$0xf]
  %v726 = vld [vmem:[%s3 + $0x35c] sm:$0xf]
  %v727 = vld [vmem:[%s3 + $0x360] sm:$0xf]
  %v728 = vld [vmem:[%s3 + $0x364] sm:$0xf]
  %v729 = vld [vmem:[%s3 + $0x368] sm:$0xf]
  %v730 = vld [vmem:[%s3 + $0x36c] sm:$0xf]
  %v731 = vld [vmem:[%s3 + $0x370] sm:$0xf]
  %v732 = vld [vmem:[%s3 + $0x374] sm:$0xf]
  %v733 = vld [vmem:[%s3 + $0x378] sm:$0xf]
  %v734 = vld [vmem:[%s3 + $0x37c] sm:$0xf]
  %v735 = vld [vmem:[%s3 + $0x380] sm:$0xf]
  %v736 = vld [vmem:[%s3 + $0x384] sm:$0xf]
  %v737 = vld [vmem:[%s3 + $0x388] sm:$0xf]
  %v738 = vld [vmem:[%s3 + $0x38c] sm:$0xf]
  %v739 = vld [vmem:[%s3 + $0x390] sm:$0xf]
  %v740 = vld [vmem:[%s3 + $0x394] sm:$0xf]
  %v741 = vld [vmem:[%s3 + $0x398] sm:$0xf]
  %v742 = vld [vmem:[%s3 + $0x39c] sm:$0xf]
  %v743 = vld [vmem:[%s3 + $0x3a0] sm:$0xf]
  %v744 = vld [vmem:[%s3 + $0x3a4] sm:$0xf]
  %v745 = vld [vmem:[%s3 + $0x3a8] sm:$0xf]
  %v746 = vld [vmem:[%s3 + $0x3ac] sm:$0xf]
  %v747 = vld [vmem:[%s3 + $0x3b0] sm:$0xf]
  %v748 = vld [vmem:[%s3 + $0x3b4] sm:$0xf]
  %v749 = vld [vmem:[%s3 + $0x3b8] sm:$0xf]
  %v750 = vld [vmem:[%s3 + $0x3bc] sm:$0xf]
  %v751 = vld [vmem:[%s3 + $0x3c0] sm:$0xf]
  %v752 = vld [vmem:[%s3 + $0x3c4] sm:$0xf]
  %v753 = vld [vmem:[%s3 + $0x3c8] sm:$0xf]
  %v754 = vld [vmem:[%s3 + $0x3cc] sm:$0xf]
  %v755 = vld [vmem:[%s3 + $0x3d0] sm:$0xf]
  %v756 = vld [vmem:[%s3 + $0x3d4] sm:$0xf]
  %v757 = vld [vmem:[%s3 + $0x3d8] sm:$0xf]
  %v758 = vld [vmem:[%s3 + $0x3dc] sm:$0xf]
  %v759 = vld [vmem:[%s3 + $0x3e0] sm:$0xf]
  %v760 = vld [vmem:[%s3 + $0x3e4] sm:$0xf]
  %v761 = vld [vmem:[%s3 + $0x3e8] sm:$0xf]
  %v762 = vld [vmem:[%s3 + $0x3ec] sm:$0xf]
  %v763 = vld [vmem:[%s3 + $0x3f0] sm:$0xf]
  %v764 = vld [vmem:[%s3 + $0x3f4] sm:$0xf]
  %v765 = vld [vmem:[%s3 + $0x3f8] sm:$0xf]
  %v766 = vld [vmem:[%s3 + $0x3fc] sm:$0xf]
  %v1023 = vunpack.c.l.b16 %v511
  %v1024 = vunpack.c.l.b16 %v512
  %v1025 = vunpack.c.l.b16 %v513
  %v1026 = vunpack.c.l.b16 %v514
  %v1027 = vunpack.c.l.b16 %v515
  %v1028 = vunpack.c.l.b16 %v516
  %v1029 = vunpack.c.l.b16 %v517
  %v1030 = vunpack.c.l.b16 %v518
  %v1031 = vunpack.c.l.b16 %v519
  %v1032 = vunpack.c.l.b16 %v520
  %v1033 = vunpack.c.l.b16 %v521
  %v1034 = vunpack.c.l.b16 %v522
  %v1035 = vunpack.c.l.b16 %v523
  %v1036 = vunpack.c.l.b16 %v524
  %v1037 = vunpack.c.l.b16 %v525
  %v1038 = vunpack.c.l.b16 %v526
  %v1039 = vunpack.c.l.b16 %v527
  %v1040 = vunpack.c.l.b16 %v528
  %v1041 = vunpack.c.l.b16 %v529
  %v1042 = vunpack.c.l.b16 %v530
  %v1043 = vunpack.c.l.b16 %v531
  %v1044 = vunpack.c.l.b16 %v532
  %v1045 = vunpack.c.l.b16 %v533
  %v1046 = vunpack.c.l.b16 %v534
  %v1047 = vunpack.c.l.b16 %v535
  %v1048 = vunpack.c.l.b16 %v536
  %v1049 = vunpack.c.l.b16 %v537
  %v1050 = vunpack.c.l.b16 %v538
  %v1051 = vunpack.c.l.b16 %v539
  %v1052 = vunpack.c.l.b16 %v540
  %v1053 = vunpack.c.l.b16 %v541
  %v1054 = vunpack.c.l.b16 %v542
  %v1055 = vunpack.c.l.b16 %v543
  %v1056 = vunpack.c.l.b16 %v544
  %v1057 = vunpack.c.l.b16 %v545
  %v1058 = vunpack.c.l.b16 %v546
  %v1059 = vunpack.c.l.b16 %v547
  %v1060 = vunpack.c.l.b16 %v548
  %v1061 = vunpack.c.l.b16 %v549
  %v1062 = vunpack.c.l.b16 %v550
  %v1063 = vunpack.c.l.b16 %v551
  %v1064 = vunpack.c.l.b16 %v552
  %v1065 = vunpack.c.l.b16 %v553
  %v1066 = vunpack.c.l.b16 %v554
  %v1067 = vunpack.c.l.b16 %v555
  %v1068 = vunpack.c.l.b16 %v556
  %v1069 = vunpack.c.l.b16 %v557
  %v1070 = vunpack.c.l.b16 %v558
  %v1071 = vunpack.c.l.b16 %v559
  %v1072 = vunpack.c.l.b16 %v560
  %v1073 = vunpack.c.l.b16 %v561
  %v1074 = vunpack.c.l.b16 %v562
  %v1075 = vunpack.c.l.b16 %v563
  %v1076 = vunpack.c.l.b16 %v564
  %v1077 = vunpack.c.l.b16 %v565
  %v1078 = vunpack.c.l.b16 %v566
  %v1079 = vunpack.c.l.b16 %v567
  %v1080 = vunpack.c.l.b16 %v568
  %v1081 = vunpack.c.l.b16 %v569
  %v1082 = vunpack.c.l.b16 %v570
  %v1083 = vunpack.c.l.b16 %v571
  %v1084 = vunpack.c.l.b16 %v572
  %v1085 = vunpack.c.l.b16 %v573
  %v1086 = vunpack.c.l.b16 %v574
  %v1087 = vunpack.c.l.b16 %v575
  %v1088 = vunpack.c.l.b16 %v576
  %v1089 = vunpack.c.l.b16 %v577
  %v1090 = vunpack.c.l.b16 %v578
  %v1091 = vunpack.c.l.b16 %v579
  %v1092 = vunpack.c.l.b16 %v580
  %v1093 = vunpack.c.l.b16 %v581
  %v1094 = vunpack.c.l.b16 %v582
  %v1095 = vunpack.c.l.b16 %v583
  %v1096 = vunpack.c.l.b16 %v584
  %v1097 = vunpack.c.l.b16 %v585
  %v1098 = vunpack.c.l.b16 %v586
  %v1099 = vunpack.c.l.b16 %v587
  %v1100 = vunpack.c.l.b16 %v588
  %v1101 = vunpack.c.l.b16 %v589
  %v1102 = vunpack.c.l.b16 %v590
  %v1103 = vunpack.c.l.b16 %v591
  %v1104 = vunpack.c.l.b16 %v592
  %v1105 = vunpack.c.l.b16 %v593
  %v1106 = vunpack.c.l.b16 %v594
  %v1107 = vunpack.c.l.b16 %v595
  %v1108 = vunpack.c.l.b16 %v596
  %v1109 = vunpack.c.l.b16 %v597
  %v1110 = vunpack.c.l.b16 %v598
  %v1111 = vunpack.c.l.b16 %v599
  %v1112 = vunpack.c.l.b16 %v600
  %v1113 = vunpack.c.l.b16 %v601
  %v1114 = vunpack.c.l.b16 %v602
  %v1115 = vunpack.c.l.b16 %v603
  %v1116 = vunpack.c.l.b16 %v604
  %v1117 = vunpack.c.l.b16 %v605
  %v1118 = vunpack.c.l.b16 %v606
  %v1119 = vunpack.c.l.b16 %v607
  %v1120 = vunpack.c.l.b16 %v608
  %v1121 = vunpack.c.l.b16 %v609
  %v1122 = vunpack.c.l.b16 %v610
  %v1123 = vunpack.c.l.b16 %v611
  %v1124 = vunpack.c.l.b16 %v612
  %v1125 = vunpack.c.l.b16 %v613
  %v1126 = vunpack.c.l.b16 %v614
  %v1127 = vunpack.c.l.b16 %v615
  %v1128 = vunpack.c.l.b16 %v616
  %v1129 = vunpack.c.l.b16 %v617
  %v1130 = vunpack.c.l.b16 %v618
  %v1131 = vunpack.c.l.b16 %v619
  %v1132 = vunpack.c.l.b16 %v620
  %v1133 = vunpack.c.l.b16 %v621
  %v1134 = vunpack.c.l.b16 %v622
  %v1135 = vunpack.c.l.b16 %v623
  %v1136 = vunpack.c.l.b16 %v624
  %v1137 = vunpack.c.l.b16 %v625
  %v1138 = vunpack.c.l.b16 %v626
  %v1139 = vunpack.c.l.b16 %v627
  %v1140 = vunpack.c.l.b16 %v628
  %v1141 = vunpack.c.l.b16 %v629
  %v1142 = vunpack.c.l.b16 %v630
  %v1143 = vunpack.c.l.b16 %v631
  %v1144 = vunpack.c.l.b16 %v632
  %v1145 = vunpack.c.l.b16 %v633
  %v1146 = vunpack.c.l.b16 %v634
  %v1147 = vunpack.c.l.b16 %v635
  %v1148 = vunpack.c.l.b16 %v636
  %v1149 = vunpack.c.l.b16 %v637
  %v1150 = vunpack.c.l.b16 %v638
  %v1151 = vunpack.c.l.b16 %v639
  %v1152 = vunpack.c.l.b16 %v640
  %v1153 = vunpack.c.l.b16 %v641
  %v1154 = vunpack.c.l.b16 %v642
  %v1155 = vunpack.c.l.b16 %v643
  %v1156 = vunpack.c.l.b16 %v644
  %v1157 = vunpack.c.l.b16 %v645
  %v1158 = vunpack.c.l.b16 %v646
  %v1159 = vunpack.c.l.b16 %v647
  %v1160 = vunpack.c.l.b16 %v648
  %v1161 = vunpack.c.l.b16 %v649
  %v1162 = vunpack.c.l.b16 %v650
  %v1163 = vunpack.c.l.b16 %v651
  %v1164 = vunpack.c.l.b16 %v652
  %v1165 = vunpack.c.l.b16 %v653
  %v1166 = vunpack.c.l.b16 %v654
  %v1167 = vunpack.c.l.b16 %v655
  %v1168 = vunpack.c.l.b16 %v656
  %v1169 = vunpack.c.l.b16 %v657
  %v1170 = vunpack.c.l.b16 %v658
  %v1171 = vunpack.c.l.b16 %v659
  %v1172 = vunpack.c.l.b16 %v660
  %v1173 = vunpack.c.l.b16 %v661
  %v1174 = vunpack.c.l.b16 %v662
  %v1175 = vunpack.c.l.b16 %v663
  %v1176 = vunpack.c.l.b16 %v664
  %v1177 = vunpack.c.l.b16 %v665
  %v1178 = vunpack.c.l.b16 %v666
  %v1179 = vunpack.c.l.b16 %v667
  %v1180 = vunpack.c.l.b16 %v668
  %v1181 = vunpack.c.l.b16 %v669
  %v1182 = vunpack.c.l.b16 %v670
  %v1183 = vunpack.c.l.b16 %v671
  %v1184 = vunpack.c.l.b16 %v672
  %v1185 = vunpack.c.l.b16 %v673
  %v1186 = vunpack.c.l.b16 %v674
  %v1187 = vunpack.c.l.b16 %v675
  %v1188 = vunpack.c.l.b16 %v676
  %v1189 = vunpack.c.l.b16 %v677
  %v1190 = vunpack.c.l.b16 %v678
  %v1191 = vunpack.c.l.b16 %v679
  %v1192 = vunpack.c.l.b16 %v680
  %v1193 = vunpack.c.l.b16 %v681
  %v1194 = vunpack.c.l.b16 %v682
  %v1195 = vunpack.c.l.b16 %v683
  %v1196 = vunpack.c.l.b16 %v684
  %v1197 = vunpack.c.l.b16 %v685
  %v1198 = vunpack.c.l.b16 %v686
  %v1199 = vunpack.c.l.b16 %v687
  %v1200 = vunpack.c.l.b16 %v688
  %v1201 = vunpack.c.l.b16 %v689
  %v1202 = vunpack.c.l.b16 %v690
  %v1203 = vunpack.c.l.b16 %v691
  %v1204 = vunpack.c.l.b16 %v692
  %v1205 = vunpack.c.l.b16 %v693
  %v1206 = vunpack.c.l.b16 %v694
  %v1207 = vunpack.c.l.b16 %v695
  %v1208 = vunpack.c.l.b16 %v696
  %v1209 = vunpack.c.l.b16 %v697
  %v1210 = vunpack.c.l.b16 %v698
  %v1211 = vunpack.c.l.b16 %v699
  %v1212 = vunpack.c.l.b16 %v700
  %v1213 = vunpack.c.l.b16 %v701
  %v1214 = vunpack.c.l.b16 %v702
  %v1215 = vunpack.c.l.b16 %v703
  %v1216 = vunpack.c.l.b16 %v704
  %v1217 = vunpack.c.l.b16 %v705
  %v1218 = vunpack.c.l.b16 %v706
  %v1219 = vunpack.c.l.b16 %v707
  %v1220 = vunpack.c.l.b16 %v708
  %v1221 = vunpack.c.l.b16 %v709
  %v1222 = vunpack.c.l.b16 %v710
  %v1223 = vunpack.c.l.b16 %v711
  %v1224 = vunpack.c.l.b16 %v712
  %v1225 = vunpack.c.l.b16 %v713
  %v1226 = vunpack.c.l.b16 %v714
  %v1227 = vunpack.c.l.b16 %v715
  %v1228 = vunpack.c.l.b16 %v716
  %v1229 = vunpack.c.l.b16 %v717
  %v1230 = vunpack.c.l.b16 %v718
  %v1231 = vunpack.c.l.b16 %v719
  %v1232 = vunpack.c.l.b16 %v720
  %v1233 = vunpack.c.l.b16 %v721
  %v1234 = vunpack.c.l.b16 %v722
  %v1235 = vunpack.c.l.b16 %v723
  %v1236 = vunpack.c.l.b16 %v724
  %v1237 = vunpack.c.l.b16 %v725
  %v1238 = vunpack.c.l.b16 %v726
  %v1239 = vunpack.c.l.b16 %v727
  %v1240 = vunpack.c.l.b16 %v728
  %v1241 = vunpack.c.l.b16 %v729
  %v1242 = vunpack.c.l.b16 %v730
  %v1243 = vunpack.c.l.b16 %v731
  %v1244 = vunpack.c.l.b16 %v732
  %v1245 = vunpack.c.l.b16 %v733
  %v1246 = vunpack.c.l.b16 %v734
  %v1247 = vunpack.c.l.b16 %v735
  %v1248 = vunpack.c.l.b16 %v736
  %v1249 = vunpack.c.l.b16 %v737
  %v1250 = vunpack.c.l.b16 %v738
  %v1251 = vunpack.c.l.b16 %v739
  %v1252 = vunpack.c.l.b16 %v740
  %v1253 = vunpack.c.l.b16 %v741
  %v1254 = vunpack.c.l.b16 %v742
  %v1255 = vunpack.c.l.b16 %v743
  %v1256 = vunpack.c.l.b16 %v744
  %v1257 = vunpack.c.l.b16 %v745
  %v1258 = vunpack.c.l.b16 %v746
  %v1259 = vunpack.c.l.b16 %v747
  %v1260 = vunpack.c.l.b16 %v748
  %v1261 = vunpack.c.l.b16 %v749
  %v1262 = vunpack.c.l.b16 %v750
  %v1263 = vunpack.c.l.b16 %v751
  %v1264 = vunpack.c.l.b16 %v752
  %v1265 = vunpack.c.l.b16 %v753
  %v1266 = vunpack.c.l.b16 %v754
  %v1267 = vunpack.c.l.b16 %v755
  %v1268 = vunpack.c.l.b16 %v756
  %v1269 = vunpack.c.l.b16 %v757
  %v1270 = vunpack.c.l.b16 %v758
  %v1271 = vunpack.c.l.b16 %v759
  %v1272 = vunpack.c.l.b16 %v760
  %v1273 = vunpack.c.l.b16 %v761
  %v1274 = vunpack.c.l.b16 %v762
  %v1275 = vunpack.c.l.b16 %v763
  %v1276 = vunpack.c.l.b16 %v764
  %v1277 = vunpack.c.l.b16 %v765
  %v1278 = vunpack.c.l.b16 %v766
  %v1279 = vpack.c.b16 %v1024, %v1023
  %v1280 = vpack.c.b16 %v1026, %v1025
  %v1281 = vpack.c.b16 %v1028, %v1027
  %v1282 = vpack.c.b16 %v1030, %v1029
  %v1283 = vpack.c.b16 %v1032, %v1031
  %v1284 = vpack.c.b16 %v1034, %v1033
  %v1285 = vpack.c.b16 %v1036, %v1035
  %v1286 = vpack.c.b16 %v1038, %v1037
  %v1287 = vpack.c.b16 %v1040, %v1039
  %v1288 = vpack.c.b16 %v1042, %v1041
  %v1289 = vpack.c.b16 %v1044, %v1043
  %v1290 = vpack.c.b16 %v1046, %v1045
  %v1291 = vpack.c.b16 %v1048, %v1047
  %v1292 = vpack.c.b16 %v1050, %v1049
  %v1293 = vpack.c.b16 %v1052, %v1051
  %v1294 = vpack.c.b16 %v1054, %v1053
  %v1295 = vpack.c.b16 %v1056, %v1055
  %v1296 = vpack.c.b16 %v1058, %v1057
  %v1297 = vpack.c.b16 %v1060, %v1059
  %v1298 = vpack.c.b16 %v1062, %v1061
  %v1299 = vpack.c.b16 %v1064, %v1063
  %v1300 = vpack.c.b16 %v1066, %v1065
  %v1301 = vpack.c.b16 %v1068, %v1067
  %v1302 = vpack.c.b16 %v1070, %v1069
  %v1303 = vpack.c.b16 %v1072, %v1071
  %v1304 = vpack.c.b16 %v1074, %v1073
  %v1305 = vpack.c.b16 %v1076, %v1075
  %v1306 = vpack.c.b16 %v1078, %v1077
  %v1307 = vpack.c.b16 %v1080, %v1079
  %v1308 = vpack.c.b16 %v1082, %v1081
  %v1309 = vpack.c.b16 %v1084, %v1083
  %v1310 = vpack.c.b16 %v1086, %v1085
  %v1311 = vpack.c.b16 %v1088, %v1087
  %v1312 = vpack.c.b16 %v1090, %v1089
  %v1313 = vpack.c.b16 %v1092, %v1091
  %v1314 = vpack.c.b16 %v1094, %v1093
  %v1315 = vpack.c.b16 %v1096, %v1095
  %v1316 = vpack.c.b16 %v1098, %v1097
  %v1317 = vpack.c.b16 %v1100, %v1099
  %v1318 = vpack.c.b16 %v1102, %v1101
  %v1319 = vpack.c.b16 %v1104, %v1103
  %v1320 = vpack.c.b16 %v1106, %v1105
  %v1321 = vpack.c.b16 %v1108, %v1107
  %v1322 = vpack.c.b16 %v1110, %v1109
  %v1323 = vpack.c.b16 %v1112, %v1111
  %v1324 = vpack.c.b16 %v1114, %v1113
  %v1325 = vpack.c.b16 %v1116, %v1115
  %v1326 = vpack.c.b16 %v1118, %v1117
  %v1327 = vpack.c.b16 %v1120, %v1119
  %v1328 = vpack.c.b16 %v1122, %v1121
  %v1329 = vpack.c.b16 %v1124, %v1123
  %v1330 = vpack.c.b16 %v1126, %v1125
  %v1331 = vpack.c.b16 %v1128, %v1127
  %v1332 = vpack.c.b16 %v1130, %v1129
  %v1333 = vpack.c.b16 %v1132, %v1131
  %v1334 = vpack.c.b16 %v1134, %v1133
  %v1335 = vpack.c.b16 %v1136, %v1135
  %v1336 = vpack.c.b16 %v1138, %v1137
  %v1337 = vpack.c.b16 %v1140, %v1139
  %v1338 = vpack.c.b16 %v1142, %v1141
  %v1339 = vpack.c.b16 %v1144, %v1143
  %v1340 = vpack.c.b16 %v1146, %v1145
  %v1341 = vpack.c.b16 %v1148, %v1147
  %v1342 = vpack.c.b16 %v1150, %v1149
  %v1343 = vpack.c.b16 %v1152, %v1151
  %v1344 = vpack.c.b16 %v1154, %v1153
  %v1345 = vpack.c.b16 %v1156, %v1155
  %v1346 = vpack.c.b16 %v1158, %v1157
  %v1347 = vpack.c.b16 %v1160, %v1159
  %v1348 = vpack.c.b16 %v1162, %v1161
  %v1349 = vpack.c.b16 %v1164, %v1163
  %v1350 = vpack.c.b16 %v1166, %v1165
  %v1351 = vpack.c.b16 %v1168, %v1167
  %v1352 = vpack.c.b16 %v1170, %v1169
  %v1353 = vpack.c.b16 %v1172, %v1171
  %v1354 = vpack.c.b16 %v1174, %v1173
  %v1355 = vpack.c.b16 %v1176, %v1175
  %v1356 = vpack.c.b16 %v1178, %v1177
  %v1357 = vpack.c.b16 %v1180, %v1179
  %v1358 = vpack.c.b16 %v1182, %v1181
  %v1359 = vpack.c.b16 %v1184, %v1183
  %v1360 = vpack.c.b16 %v1186, %v1185
  %v1361 = vpack.c.b16 %v1188, %v1187
  %v1362 = vpack.c.b16 %v1190, %v1189
  %v1363 = vpack.c.b16 %v1192, %v1191
  %v1364 = vpack.c.b16 %v1194, %v1193
  %v1365 = vpack.c.b16 %v1196, %v1195
  %v1366 = vpack.c.b16 %v1198, %v1197
  %v1367 = vpack.c.b16 %v1200, %v1199
  %v1368 = vpack.c.b16 %v1202, %v1201
  %v1369 = vpack.c.b16 %v1204, %v1203
  %v1370 = vpack.c.b16 %v1206, %v1205
  %v1371 = vpack.c.b16 %v1208, %v1207
  %v1372 = vpack.c.b16 %v1210, %v1209
  %v1373 = vpack.c.b16 %v1212, %v1211
  %v1374 = vpack.c.b16 %v1214, %v1213
  %v1375 = vpack.c.b16 %v1216, %v1215
  %v1376 = vpack.c.b16 %v1218, %v1217
  %v1377 = vpack.c.b16 %v1220, %v1219
  %v1378 = vpack.c.b16 %v1222, %v1221
  %v1379 = vpack.c.b16 %v1224, %v1223
  %v1380 = vpack.c.b16 %v1226, %v1225
  %v1381 = vpack.c.b16 %v1228, %v1227
  %v1382 = vpack.c.b16 %v1230, %v1229
  %v1383 = vpack.c.b16 %v1232, %v1231
  %v1384 = vpack.c.b16 %v1234, %v1233
  %v1385 = vpack.c.b16 %v1236, %v1235
  %v1386 = vpack.c.b16 %v1238, %v1237
  %v1387 = vpack.c.b16 %v1240, %v1239
  %v1388 = vpack.c.b16 %v1242, %v1241
  %v1389 = vpack.c.b16 %v1244, %v1243
  %v1390 = vpack.c.b16 %v1246, %v1245
  %v1391 = vpack.c.b16 %v1248, %v1247
  %v1392 = vpack.c.b16 %v1250, %v1249
  %v1393 = vpack.c.b16 %v1252, %v1251
  %v1394 = vpack.c.b16 %v1254, %v1253
  %v1395 = vpack.c.b16 %v1256, %v1255
  %v1396 = vpack.c.b16 %v1258, %v1257
  %v1397 = vpack.c.b16 %v1260, %v1259
  %v1398 = vpack.c.b16 %v1262, %v1261
  %v1399 = vpack.c.b16 %v1264, %v1263
  %v1400 = vpack.c.b16 %v1266, %v1265
  %v1401 = vpack.c.b16 %v1268, %v1267
  %v1402 = vpack.c.b16 %v1270, %v1269
  %v1403 = vpack.c.b16 %v1272, %v1271
  %v1404 = vpack.c.b16 %v1274, %v1273
  %v1405 = vpack.c.b16 %v1276, %v1275
  %v1406 = vpack.c.b16 %v1278, %v1277
  %1535 = vmatpush.bf16.msra.mxu0 %v1286
  %1536 = vmatpush.bf16.msra.mxu0 %v1285
  %1537 = vmatpush.bf16.msra.mxu0 %v1284
  %1538 = vmatpush.bf16.msra.mxu0 %v1283
  %1539 = vmatpush.bf16.msra.mxu0 %v1282
  %1540 = vmatpush.bf16.msra.mxu0 %v1281
  %1541 = vmatpush.bf16.msra.mxu0 %v1280
  %1542 = vmatpush.bf16.msra.mxu0 %v1279
  %1543 = vmatmul.bf16.gmra.mxu0 %v495
  %v1544 = vpop.f32.mrf.mxu0
  %v1545 = vadd.f32 0.0, %v1544
  %v1546 = vpop.f32.mrf.mxu0
  %v1547 = vadd.f32 0.0, %v1546
  %1548 = vdwg.mxu0
  %1549 = vmatpush.bf16.msra.mxu0 %v1294
  %1550 = vmatpush.bf16.msra.mxu0 %v1293
  %1551 = vmatpush.bf16.msra.mxu0 %v1292
  %1552 = vmatpush.bf16.msra.mxu0 %v1291
  %1553 = vmatpush.bf16.msra.mxu0 %v1290
  %1554 = vmatpush.bf16.msra.mxu0 %v1289
  %1555 = vmatpush.bf16.msra.mxu0 %v1288
  %1556 = vmatpush.bf16.msra.mxu0 %v1287
  %1557 = vmatmul.bf16.gmra.mxu0 %v496
  %v1558 = vpop.f32.mrf.mxu0
  %v1559 = vadd.f32 %v1545, %v1558
  %v1560 = vpop.f32.mrf.mxu0
  %v1561 = vadd.f32 %v1547, %v1560
  %1562 = vdwg.mxu0
  %1563 = vmatpush.bf16.msra.mxu0 %v1302
  %1564 = vmatpush.bf16.msra.mxu0 %v1301
  %1565 = vmatpush.bf16.msra.mxu0 %v1300
  %1566 = vmatpush.bf16.msra.mxu0 %v1299
  %1567 = vmatpush.bf16.msra.mxu0 %v1298
  %1568 = vmatpush.bf16.msra.mxu0 %v1297
  %1569 = vmatpush.bf16.msra.mxu0 %v1296
  %1570 = vmatpush.bf16.msra.mxu0 %v1295
  %1571 = vmatmul.bf16.gmra.mxu0 %v497
  %v1572 = vpop.f32.mrf.mxu0
  %v1573 = vadd.f32 %v1559, %v1572
  %v1574 = vpop.f32.mrf.mxu0
  %v1575 = vadd.f32 %v1561, %v1574
  %1576 = vdwg.mxu0
  %1577 = vmatpush.bf16.msra.mxu0 %v1310
  %1578 = vmatpush.bf16.msra.mxu0 %v1309
  %1579 = vmatpush.bf16.msra.mxu0 %v1308
  %1580 = vmatpush.bf16.msra.mxu0 %v1307
  %1581 = vmatpush.bf16.msra.mxu0 %v1306
  %1582 = vmatpush.bf16.msra.mxu0 %v1305
  %1583 = vmatpush.bf16.msra.mxu0 %v1304
  %1584 = vmatpush.bf16.msra.mxu0 %v1303
  %1585 = vmatmul.bf16.gmra.mxu0 %v498
  %v1586 = vpop.f32.mrf.mxu0
  %v1587 = vadd.f32 %v1573, %v1586
  %v1588 = vpop.f32.mrf.mxu0
  %v1589 = vadd.f32 %v1575, %v1588
  %1590 = vdwg.mxu0
  %1591 = vmatpush.bf16.msra.mxu0 %v1318
  %1592 = vmatpush.bf16.msra.mxu0 %v1317
  %1593 = vmatpush.bf16.msra.mxu0 %v1316
  %1594 = vmatpush.bf16.msra.mxu0 %v1315
  %1595 = vmatpush.bf16.msra.mxu0 %v1314
  %1596 = vmatpush.bf16.msra.mxu0 %v1313
  %1597 = vmatpush.bf16.msra.mxu0 %v1312
  %1598 = vmatpush.bf16.msra.mxu0 %v1311
  %1599 = vmatmul.bf16.gmra.mxu0 %v499
  %v1600 = vpop.f32.mrf.mxu0
  %v1601 = vadd.f32 %v1587, %v1600
  %v1602 = vpop.f32.mrf.mxu0
  %v1603 = vadd.f32 %v1589, %v1602
  %1604 = vdwg.mxu0
  %1605 = vmatpush.bf16.msra.mxu0 %v1326
  %1606 = vmatpush.bf16.msra.mxu0 %v1325
  %1607 = vmatpush.bf16.msra.mxu0 %v1324
  %1608 = vmatpush.bf16.msra.mxu0 %v1323
  %1609 = vmatpush.bf16.msra.mxu0 %v1322
  %1610 = vmatpush.bf16.msra.mxu0 %v1321
  %1611 = vmatpush.bf16.msra.mxu0 %v1320
  %1612 = vmatpush.bf16.msra.mxu0 %v1319
  %1613 = vmatmul.bf16.gmra.mxu0 %v500
  %v1614 = vpop.f32.mrf.mxu0
  %v1615 = vadd.f32 %v1601, %v1614
  %v1616 = vpop.f32.mrf.mxu0
  %v1617 = vadd.f32 %v1603, %v1616
  %1618 = vdwg.mxu0
  %1619 = vmatpush.bf16.msra.mxu0 %v1334
  %1620 = vmatpush.bf16.msra.mxu0 %v1333
  %1621 = vmatpush.bf16.msra.mxu0 %v1332
  %1622 = vmatpush.bf16.msra.mxu0 %v1331
  %1623 = vmatpush.bf16.msra.mxu0 %v1330
  %1624 = vmatpush.bf16.msra.mxu0 %v1329
  %1625 = vmatpush.bf16.msra.mxu0 %v1328
  %1626 = vmatpush.bf16.msra.mxu0 %v1327
  %1627 = vmatmul.bf16.gmra.mxu0 %v501
  %v1628 = vpop.f32.mrf.mxu0
  %v1629 = vadd.f32 %v1615, %v1628
  %v1630 = vpop.f32.mrf.mxu0
  %v1631 = vadd.f32 %v1617, %v1630
  %1632 = vdwg.mxu0
  %1633 = vmatpush.bf16.msra.mxu0 %v1342
  %1634 = vmatpush.bf16.msra.mxu0 %v1341
  %1635 = vmatpush.bf16.msra.mxu0 %v1340
  %1636 = vmatpush.bf16.msra.mxu0 %v1339
  %1637 = vmatpush.bf16.msra.mxu0 %v1338
  %1638 = vmatpush.bf16.msra.mxu0 %v1337
  %1639 = vmatpush.bf16.msra.mxu0 %v1336
  %1640 = vmatpush.bf16.msra.mxu0 %v1335
  %1641 = vmatmul.bf16.gmra.mxu0 %v502
  %v1642 = vpop.f32.mrf.mxu0
  %v1643 = vadd.f32 %v1629, %v1642
  %v1644 = vpop.f32.mrf.mxu0
  %v1645 = vadd.f32 %v1631, %v1644
  %1646 = vdwg.mxu0
  %1647 = vmatpush.bf16.msra.mxu0 %v1350
  %1648 = vmatpush.bf16.msra.mxu0 %v1349
  %1649 = vmatpush.bf16.msra.mxu0 %v1348
  %1650 = vmatpush.bf16.msra.mxu0 %v1347
  %1651 = vmatpush.bf16.msra.mxu0 %v1346
  %1652 = vmatpush.bf16.msra.mxu0 %v1345
  %1653 = vmatpush.bf16.msra.mxu0 %v1344
  %1654 = vmatpush.bf16.msra.mxu0 %v1343
  %1655 = vmatmul.bf16.gmra.mxu0 %v503
  %v1656 = vpop.f32.mrf.mxu0
  %v1657 = vadd.f32 %v1643, %v1656
  %v1658 = vpop.f32.mrf.mxu0
  %v1659 = vadd.f32 %v1645, %v1658
  %1660 = vdwg.mxu0
  %1661 = vmatpush.bf16.msra.mxu0 %v1358
  %1662 = vmatpush.bf16.msra.mxu0 %v1357
  %1663 = vmatpush.bf16.msra.mxu0 %v1356
  %1664 = vmatpush.bf16.msra.mxu0 %v1355
  %1665 = vmatpush.bf16.msra.mxu0 %v1354
  %1666 = vmatpush.bf16.msra.mxu0 %v1353
  %1667 = vmatpush.bf16.msra.mxu0 %v1352
  %1668 = vmatpush.bf16.msra.mxu0 %v1351
  %1669 = vmatmul.bf16.gmra.mxu0 %v504
  %v1670 = vpop.f32.mrf.mxu0
  %v1671 = vadd.f32 %v1657, %v1670
  %v1672 = vpop.f32.mrf.mxu0
  %v1673 = vadd.f32 %v1659, %v1672
  %1674 = vdwg.mxu0
  %1675 = vmatpush.bf16.msra.mxu0 %v1366
  %1676 = vmatpush.bf16.msra.mxu0 %v1365
  %1677 = vmatpush.bf16.msra.mxu0 %v1364
  %1678 = vmatpush.bf16.msra.mxu0 %v1363
  %1679 = vmatpush.bf16.msra.mxu0 %v1362
  %1680 = vmatpush.bf16.msra.mxu0 %v1361
  %1681 = vmatpush.bf16.msra.mxu0 %v1360
  %1682 = vmatpush.bf16.msra.mxu0 %v1359
  %1683 = vmatmul.bf16.gmra.mxu0 %v505
  %v1684 = vpop.f32.mrf.mxu0
  %v1685 = vadd.f32 %v1671, %v1684
  %v1686 = vpop.f32.mrf.mxu0
  %v1687 = vadd.f32 %v1673, %v1686
  %1688 = vdwg.mxu0
  %1689 = vmatpush.bf16.msra.mxu0 %v1374
  %1690 = vmatpush.bf16.msra.mxu0 %v1373
  %1691 = vmatpush.bf16.msra.mxu0 %v1372
  %1692 = vmatpush.bf16.msra.mxu0 %v1371
  %1693 = vmatpush.bf16.msra.mxu0 %v1370
  %1694 = vmatpush.bf16.msra.mxu0 %v1369
  %1695 = vmatpush.bf16.msra.mxu0 %v1368
  %1696 = vmatpush.bf16.msra.mxu0 %v1367
  %1697 = vmatmul.bf16.gmra.mxu0 %v506
  %v1698 = vpop.f32.mrf.mxu0
  %v1699 = vadd.f32 %v1685, %v1698
  %v1700 = vpop.f32.mrf.mxu0
  %v1701 = vadd.f32 %v1687, %v1700
  %1702 = vdwg.mxu0
  %1703 = vmatpush.bf16.msra.mxu0 %v1382
  %1704 = vmatpush.bf16.msra.mxu0 %v1381
  %1705 = vmatpush.bf16.msra.mxu0 %v1380
  %1706 = vmatpush.bf16.msra.mxu0 %v1379
  %1707 = vmatpush.bf16.msra.mxu0 %v1378
  %1708 = vmatpush.bf16.msra.mxu0 %v1377
  %1709 = vmatpush.bf16.msra.mxu0 %v1376
  %1710 = vmatpush.bf16.msra.mxu0 %v1375
  %1711 = vmatmul.bf16.gmra.mxu0 %v507
  %v1712 = vpop.f32.mrf.mxu0
  %v1713 = vadd.f32 %v1699, %v1712
  %v1714 = vpop.f32.mrf.mxu0
  %v1715 = vadd.f32 %v1701, %v1714
  %1716 = vdwg.mxu0
  %1717 = vmatpush.bf16.msra.mxu0 %v1390
  %1718 = vmatpush.bf16.msra.mxu0 %v1389
  %1719 = vmatpush.bf16.msra.mxu0 %v1388
  %1720 = vmatpush.bf16.msra.mxu0 %v1387
  %1721 = vmatpush.bf16.msra.mxu0 %v1386
  %1722 = vmatpush.bf16.msra.mxu0 %v1385
  %1723 = vmatpush.bf16.msra.mxu0 %v1384
  %1724 = vmatpush.bf16.msra.mxu0 %v1383
  %1725 = vmatmul.bf16.gmra.mxu0 %v508
  %v1726 = vpop.f32.mrf.mxu0
  %v1727 = vadd.f32 %v1713, %v1726
  %v1728 = vpop.f32.mrf.mxu0
  %v1729 = vadd.f32 %v1715, %v1728
  %1730 = vdwg.mxu0
  %1731 = vmatpush.bf16.msra.mxu0 %v1398
  %1732 = vmatpush.bf16.msra.mxu0 %v1397
  %1733 = vmatpush.bf16.msra.mxu0 %v1396
  %1734 = vmatpush.bf16.msra.mxu0 %v1395
  %1735 = vmatpush.bf16.msra.mxu0 %v1394
  %1736 = vmatpush.bf16.msra.mxu0 %v1393
  %1737 = vmatpush.bf16.msra.mxu0 %v1392
  %1738 = vmatpush.bf16.msra.mxu0 %v1391
  %1739 = vmatmul.bf16.gmra.mxu0 %v509
  %v1740 = vpop.f32.mrf.mxu0
  %v1741 = vadd.f32 %v1727, %v1740
  %v1742 = vpop.f32.mrf.mxu0
  %v1743 = vadd.f32 %v1729, %v1742
  %1744 = vdwg.mxu0
  %1745 = vmatpush.bf16.msra.mxu0 %v1406
  %1746 = vmatpush.bf16.msra.mxu0 %v1405
  %1747 = vmatpush.bf16.msra.mxu0 %v1404
  %1748 = vmatpush.bf16.msra.mxu0 %v1403
  %1749 = vmatpush.bf16.msra.mxu0 %v1402
  %1750 = vmatpush.bf16.msra.mxu0 %v1401
  %1751 = vmatpush.bf16.msra.mxu0 %v1400
  %1752 = vmatpush.bf16.msra.mxu0 %v1399
  %1753 = vmatmul.bf16.gmra.mxu0 %v510
  %v1754 = vpop.f32.mrf.mxu0
  %v1755 = vadd.f32 %v1741, %v1754
  %v1756 = vpop.f32.mrf.mxu0
  %v1757 = vadd.f32 %v1743, %v1756
  %1758 = vdwg.mxu0
  %1761 = vrot.lane.b32.xlu0 %v1755, 126
  %v1762 = vpop.permute.xlu0 %1761
  %1763 = vrot.lane.b32.xlu0 %v1757, 126
  %v1764 = vpop.permute.xlu0 %1763
  %1767 = vrot.lane.b32.xlu0 %v1755, 124
  %v1768 = vpop.permute.xlu0 %1767
  %1769 = vrot.lane.b32.xlu0 %v1757, 124
  %v1770 = vpop.permute.xlu0 %1769
  %1773 = vrot.lane.b32.xlu0 %v1755, 122
  %v1774 = vpop.permute.xlu0 %1773
  %1775 = vrot.lane.b32.xlu0 %v1757, 122
  %v1776 = vpop.permute.xlu0 %1775
  %v1779 = vld [vmem:[%s4] sm:$0xff]
  %v1780 = vld [vmem:[%s4 + $0x8] sm:$0xff]
  %v1781 = vld [vmem:[%s5] sm:$0xff]
  %v1782 = vld [vmem:[%s5 + $0x8] sm:$0xff]
  %1784 = vset.pattern.permute.xlu0 0
  %1785 = vperm.xlu0 %1784, %v1781
  %v1786 = vpop.permute.xlu0 %1785
  %1789 = vset.pattern.permute.xlu0 0
  %1790 = vperm.xlu0 %1789, %v1782
  %v1791 = vpop.permute.xlu0 %1790
  %vm1793 = vcmask 523264
  %v1795 = vsel %vm1793, %v1779, 0
  %v1798 = vsel %vm1793, %v1780, 0
  %1800 = vmatpush.msra.mxu0 0.0
  %1801 = vmatpush.msra.mxu0 0.0
  %1802 = vmatpush.msra.mxu0 0.0
  %1803 = vmatpush.msra.mxu0 0.0
  %1804 = vmatpush.msra.mxu0 0.0
  %1805 = vmatpush.msra.mxu0 0.0
  %1806 = vmatpush.msra.mxu0 0.0
  %1807 = vmatpush.msra.mxu0 0.0
  %1808 = vmatpush.msra.mxu0 %v1776
  %1809 = vmatpush.msra.mxu0 %v1774
  %1810 = vmatpush.msra.mxu0 %v1770
  %1811 = vmatpush.msra.mxu0 %v1768
  %1812 = vmatpush.msra.mxu0 %v1764
  %1813 = vmatpush.msra.mxu0 %v1762
  %1814 = vmatpush.msra.mxu0 %v1757
  %1815 = vmatpush.msra.mxu0 %v1755
  %1816 = vmatmul.f32.gmra.mxu0 %v1795
  %v1817 = vpop.f32.mrf.mxu0
  %v1818 = vadd.f32 %v1786, %v1817
  %1819 = vmatmul.f32.gmra.mxu0 %v1798
  %v1820 = vpop.f32.mrf.mxu0
  %v1821 = vadd.f32 %v1791, %v1820
  %1822 = vdwg.mxu0
  %vm1823 = vcmask 15360
  %1824 = vst.msk [vmem:[%s6] sm:$0xff] %vm1823, %v1818
  %1825 = vst.msk [vmem:[%s6 + $0x8] sm:$0xff] %vm1823, %v1821
  // Predicated region
  $region26: #{resnet_forward.1} parent=0 // pred_check
    _
  $region27: #{resnet_forward.1} parent=0 // pred_check_branch
    %1827 = sbr.rel (0) target = $region29
  $region28: #{resnet_forward.1} parent=0 // pred_region
    _
  $region29: #{resnet_forward.1} parent=0 // pred_fallthru
    _
  // Predicated region
  $region30: #{resnet_forward.1} parent=0 // pred_check
    _
  $region31: #{resnet_forward.1} parent=0 // pred_check_branch
    %1829 = sbr.rel (0) target = $region33
  $region32: #{resnet_forward.1} parent=0 // pred_region
    _
  $region33: #{resnet_forward.1} parent=0 // pred_fallthru
    _

</llo_original>
